<compile_context>
chip_gen: v5e
topology: v5e:2x2
jax: 0.10.0
libtpu: 0.0.40
codegen_flags: <defaults>
</compile_context>

<pallas_src>
import functools

import jax
import jax.numpy as jnp
from jax.experimental import pallas as pl
from jax.experimental.pallas import tpu as pltpu


def _eca_cbam_kernel(x_ref, w_eca_ref, w_sp_ref, bn_bias_ref, o_ref, *,
                     dilations, H, W, k):
    Bt, C, HW = x_ref.shape
    maxd = max(dilations)
    half = k // 2
    n_d = len(dilations)

    xv = x_ref[...]                                 # input dtype, no eager f32 copy

    # ---------------- ECA: global avg pool + sum of dilated Conv1d(1->1) -----
    # f32 accumulation for the HW mean (per review correctness note).
    avg = jnp.mean(xv.astype(jnp.float32), axis=2)  # (Bt, C)
    zc = jnp.zeros((Bt, maxd), jnp.float32)
    yp = jnp.concatenate([zc, avg, zc], axis=1)     # (Bt, C + 2*maxd)
    chan = jnp.zeros((Bt, C), jnp.float32)
    for idx in range(n_d):
        d = dilations[idx]
        for j in range(k):
            off = maxd + (j - half) * d
            chan = chan + w_eca_ref[idx * k + j] * yp[:, off:off + C]
    attn = jax.nn.sigmoid(chan)                     # (Bt, C) f32

    # ---------------- channel pooling fused with the ECA rescale -------------
    # Stream channels: no (Bt, C, HW) y_eca intermediate; each channel is read
    # straight from the input block, scaled, and folded into running max/sum.
    # (Python loop: C is a compile-time constant; for very large C a chunked
    # fori_loop would bound the unroll.)
    cp_max = None
    cp_sum = None
    for c in range(C):
        yc = attn[:, c:c + 1] * x_ref[:, c, :]      # (Bt, HW) f32
        cp_max = yc if cp_max is None else jnp.maximum(cp_max, yc)
        cp_sum = yc if cp_sum is None else cp_sum + yc
    cp_mean = cp_sum * (1.0 / C)

    # ---------------- dilated SpatialGate -------------------------------------
    pad = maxd * (W + 1)                            # covers any |di*W + dj|
    zp = jnp.zeros((Bt, pad), jnp.float32)
    max_p = jnp.concatenate([zp, cp_max, zp], axis=1)
    mean_p = jnp.concatenate([zp, cp_mean, zp], axis=1)

    col = jax.lax.broadcasted_iota(jnp.int32, (1, HW), 1) % W

    def w_sp(idx, ic, ki, kj):                      # SMEM scalar read
        return w_sp_ref[((idx * 2 + ic) * k + ki) * k + kj]

    # Center tap (di=dj=0) is shared by every dilation: pre-sum its weights and
    # initialize `gate` from it (plus the summed BatchNorm bias) — no zero fill,
    # no padded-array slice needed for it.
    wc_max = w_sp(0, 0, half, half)
    wc_mean = w_sp(0, 1, half, half)
    for idx in range(1, n_d):
        wc_max = wc_max + w_sp(idx, 0, half, half)
        wc_mean = wc_mean + w_sp(idx, 1, half, half)
    gate = wc_max * cp_max + wc_mean * cp_mean + bn_bias_ref[0]

    # Non-center taps: both pooled channels are accumulated inside the ki loop,
    # so the column-validity mask and the gate add happen once per (d, kj).
    for idx in range(n_d):
        d = dilations[idx]
        for kj in range(k):
            dj = (kj - half) * d
            acc = None
            for ki in range(k):
                di = (ki - half) * d
                if di == 0 and dj == 0:
                    continue                        # center already in gate init
                off = pad + di * W + dj
                t = (w_sp(idx, 0, ki, kj) * max_p[:, off:off + HW]
                     + w_sp(idx, 1, ki, kj) * mean_p[:, off:off + HW])
                acc = t if acc is None else acc + t
            if acc is None:
                continue
            if dj == 0:
                gate = gate + acc                   # pure row shift: no mask needed
            else:
                ok = jnp.logical_and(col + dj >= 0, col + dj < W)
                gate = gate + jnp.where(ok, acc, 0.0)
    sp = jax.nn.sigmoid(gate)                       # (Bt, HW)

    # ---------------- fused output store: x * attn * sp -----------------------
    o_ref[...] = ((xv * attn[:, :, None]) * sp[:, None, :]).astype(o_ref.dtype)


def _num_tensorcores():
    try:
        info = pltpu.get_tpu_info()
        for name in ("num_cores", "core_count", "num_tensorcores",
                     "tensorcore_count"):
            v = getattr(info, name, None)
            if isinstance(v, int) and v > 0:
                return v
    except Exception:
        pass
    try:
        v = getattr(jax.devices()[0], "num_cores", None)
        if isinstance(v, int) and v > 0:
            return v
    except Exception:
        pass
    return 1


def _vmem_capacity_bytes():
    try:
        v = getattr(pltpu.get_tpu_info(), "vmem_capacity_bytes", None)
        if v:
            return int(v)
    except Exception:
        pass
    return 64 << 20                 # conservative: v7x per-TensorCore budget


def _choose_bt(B, bytes_per_img, n_cores, target_bytes):
    """Images per grid step.

    Big blocks amortize the ~0.35us/step pipeline overhead.  On multi-core
    chips (v7x) keep >= 2 grid steps per TensorCore (when B allows) so the
    'parallel' grid axis still overlaps DMA with compute on each core; on
    single-core v5e/v6e do NOT shrink the block.
    """
    bt = max(1, min(B, target_bytes // max(bytes_per_img, 1)))
    if n_cores > 1:
        bt = min(bt, max(1, B // (2 * n_cores)))
    while B % bt:
        bt -= 1
    return bt


def eca_cbam(x, w_eca, w_sp, sp_bn_scale, sp_bn_bias, dilations):
    """x: (B,C,H,W); w_eca: (n_d,k); w_sp: (n_d,2,3,3); bn_*: (n_d,)."""
    B, C, H, W = x.shape
    HW = H * W
    dilations = tuple(int(d) for d in dilations)
    k = int(w_eca.shape[-1])

    # Fold each spatial conv's eval-mode BN scale into its weights; biases sum.
    w_sp_folded = (w_sp * sp_bn_scale[:, None, None, None]).astype(jnp.float32)
    bn_bias_total = jnp.sum(sp_bn_bias).reshape(1).astype(jnp.float32)
    w_eca_flat = w_eca.reshape(-1).astype(jnp.float32)
    w_sp_flat = w_sp_folded.reshape(-1)

    itemsize = x.dtype.itemsize
    n_cores = _num_tensorcores()
    vmem_cap = _vmem_capacity_bytes()
    # Larger blocks on chips with large physical VMEM (v5e/v6e: 128 MiB).
    target_bytes = (6 << 20) if vmem_cap >= (96 << 20) else (4 << 20)
    bt = _choose_bt(B, C * HW * itemsize, n_cores, target_bytes)
    grid = (B // bt,)

    # Explicit scoped-VMEM budget: 2x in + 2x out double buffers plus the
    # (bt, HW)-sized gate intermediates and some compiler headroom, clamped
    # well under the physical VMEM size.
    block_bytes = bt * C * HW * itemsize
    need = 4 * block_bytes + 64 * bt * HW * 4 + (4 << 20)
    vmem_limit = int(max(32 << 20, min(need, (vmem_cap * 3) // 4)))

    x_flat = x.reshape(B, C, HW)                   # lane-dense HBM view (free)
    kernel = functools.partial(_eca_cbam_kernel, dilations=dilations,
                               H=H, W=W, k=k)

    cost = pl.CostEstimate(
        flops=int(5 * B * C * HW + 80 * B * HW),
        transcendentals=int(B * (C + HW)),
        bytes_accessed=int(2 * B * C * HW * itemsize))

    out = pl.pallas_call(
        kernel,
        out_shape=jax.ShapeDtypeStruct((B, C, HW), x.dtype),
        grid=grid,
        in_specs=[
            pl.BlockSpec((bt, C, HW), lambda b: (b, 0, 0)),
            pl.BlockSpec(w_eca_flat.shape, lambda b: (0,),
                         memory_space=pltpu.MemorySpace.SMEM),
            pl.BlockSpec(w_sp_flat.shape, lambda b: (0,),
                         memory_space=pltpu.MemorySpace.SMEM),
            pl.BlockSpec(bn_bias_total.shape, lambda b: (0,),
                         memory_space=pltpu.MemorySpace.SMEM),
        ],
        out_specs=pl.BlockSpec((bt, C, HW), lambda b: (b, 0, 0)),
        compiler_params=pltpu.CompilerParams(
            dimension_semantics=("parallel",),
            vmem_limit_bytes=vmem_limit),
        cost_estimate=cost,
    )(x_flat, w_eca_flat, w_sp_flat, bn_bias_total)
    return out.reshape(B, C, H, W)


def reference(x, w_eca, w_sp, sp_bn_scale, sp_bn_bias, dilations):
    """Pure-JAX mirror of the PyTorch forward (eval mode)."""
    B, C, H, W = x.shape
    x = x.astype(jnp.float32)
    maxd = max(dilations)

    # ECA channel attention.
    y = x.mean(axis=(2, 3))                                        # (B, C)
    yp = jnp.pad(y, ((0, 0), (maxd, maxd)))
    chan = jnp.zeros((B, C), jnp.float32)
    for idx, d in enumerate(dilations):
        for j in range(3):
            off = maxd + (j - 1) * d
            chan = chan + w_eca[idx, j] * yp[:, off:off + C]
    y_eca = x * jax.nn.sigmoid(chan)[:, :, None, None]

    # Dilated SpatialGate: ChannelPool order is (max, mean).
    cp = jnp.stack([y_eca.max(axis=1), y_eca.mean(axis=1)], axis=1)
    cpp = jnp.pad(cp, ((0, 0), (0, 0), (maxd, maxd), (maxd, maxd)))
    gate = jnp.zeros((B, H, W), jnp.float32)
    for idx, d in enumerate(dilations):
        conv = jnp.zeros((B, H, W), jnp.float32)
        for ic in range(2):
            for ki in range(3):
                for kj in range(3):
                    oi = maxd + (ki - 1) * d
                    oj = maxd + (kj - 1) * d
                    conv = conv + w_sp[idx, ic, ki, kj] * \
                        cpp[:, ic, oi:oi + H, oj:oj + W]
        gate = gate + conv * sp_bn_scale[idx] + sp_bn_bias[idx]
    return y_eca * jax.nn.sigmoid(gate)[:, None, :, :]


if __name__ == "__main__":
    B, C, H, W = 2, 16, 16, 16
    strid, k_size, rates = 1, 3, [2, 3, 4]
    dilations = [1] + [strid * r for r in rates]    # [1, 2, 3, 4]
    n_d = len(dilations)

    key = jax.random.PRNGKey(0)
    kx, k1, k2, k3 = jax.random.split(key, 4)
    x = jax.random.normal(kx, (B, C, H, W), jnp.float32)

    # Synthetic weights with shapes matching the nn.Module __init__.
    w_eca = jax.random.normal(k1, (n_d, k_size), jnp.float32) * 0.3
    w_sp = jax.random.normal(k2, (n_d, 2, 3, 3), jnp.float32) * 0.1

    # Per-conv BatchNorm2d(1), eval mode, folded into scale/bias.
    eps = 1e-5
    gamma = 1.0 + 0.1 * jax.random.normal(k3, (n_d,), jnp.float32)
    beta = jnp.linspace(-0.05, 0.05, n_d).astype(jnp.float32)
    r_mean = jnp.zeros((n_d,), jnp.float32)
    r_var = jnp.ones((n_d,), jnp.float32)
    sp_bn_scale = gamma / jnp.sqrt(r_var + eps)
    sp_bn_bias = beta - r_mean * sp_bn_scale

    out = eca_cbam(x, w_eca, w_sp, sp_bn_scale, sp_bn_bias, dilations)
    out = jax.block_until_ready(out)

    ref = reference(x, w_eca, w_sp, sp_bn_scale, sp_bn_bias, dilations)
    max_err = float(jnp.max(jnp.abs(out - ref)))
    assert jnp.allclose(out, ref, atol=1e-4, rtol=1e-4), max_err
    print("KERNEL_OK")
</pallas_src>

<mosaic_0001>
module attributes {stable_mosaic.version = 11 : i64} {
  func.func @_eca_cbam_kernel(%arg0: i32, %arg1: memref<2x16x256xf32, #tpu.memory_space<vmem>>, %arg2: memref<12xf32, #tpu.memory_space<smem>>, %arg3: memref<72xf32, #tpu.memory_space<smem>>, %arg4: memref<1xf32, #tpu.memory_space<smem>>, %arg5: memref<2x16x256xf32, #tpu.memory_space<vmem>>) attributes {dimension_semantics = [#tpu.dimension_semantics<parallel>], iteration_bounds = array<i64: 1>, scalar_prefetch = 0 : i64, scratch_operands = 0 : i64, tpu.core_type = #tpu.core_type<tc>, window_params = [{transform_indices = @transform_0, window_bounds = array<i64: 2, 16, 256>}, {transform_indices = @transform_1, window_bounds = array<i64: 12>}, {transform_indices = @transform_2, window_bounds = array<i64: 72>}, {transform_indices = @transform_3, window_bounds = array<i64: 1>}, {transform_indices = @transform_4, window_bounds = array<i64: 2, 16, 256>}]} {
    %c0 = arith.constant 0 : index
    %c0_0 = arith.constant 0 : index
    %c0_1 = arith.constant 0 : index
    %0 = vector.load %arg1[%c0, %c0_0, %c0_1] : memref<2x16x256xf32, #tpu.memory_space<vmem>>, vector<2x16x256xf32>
    %cst = arith.constant dense<0.000000e+00> : vector<2x16xf32>
    %1 = vector.multi_reduction <add>, %0, %cst [2] : vector<2x16x256xf32> to vector<2x16xf32>
    %cst_2 = arith.constant 2.560000e+02 : f32
    %2 = vector.broadcast %cst_2 : f32 to vector<2x16xf32>
    %3 = arith.divf %1, %2 : vector<2x16xf32>
    %cst_3 = arith.constant 0.000000e+00 : f32
    %4 = vector.broadcast %cst_3 : f32 to vector<2x4xf32>
    %5 = tpu.concatenate %4, %3, %4 in 1 : vector<2x4xf32>, vector<2x16xf32>, vector<2x4xf32> -> vector<2x24xf32>
    %cst_4 = arith.constant 0.000000e+00 : f32
    %6 = vector.broadcast %cst_4 : f32 to vector<2x16xf32>
    %c0_5 = arith.constant 0 : index
    %7 = memref.load %arg2[%c0_5] : memref<12xf32, #tpu.memory_space<smem>>
    %8 = vector.extract_strided_slice %5 {offsets = [0, 3], sizes = [2, 16], strides = [1, 1]} : vector<2x24xf32> to vector<2x16xf32>
    %9 = vector.broadcast %7 : f32 to vector<2x16xf32>
    %10 = arith.mulf %9, %8 : vector<2x16xf32>
    %11 = arith.addf %6, %10 : vector<2x16xf32>
    %c1 = arith.constant 1 : index
    %12 = memref.load %arg2[%c1] : memref<12xf32, #tpu.memory_space<smem>>
    %13 = vector.extract_strided_slice %5 {offsets = [0, 4], sizes = [2, 16], strides = [1, 1]} : vector<2x24xf32> to vector<2x16xf32>
    %14 = vector.broadcast %12 : f32 to vector<2x16xf32>
    %15 = arith.mulf %14, %13 : vector<2x16xf32>
    %16 = arith.addf %11, %15 : vector<2x16xf32>
    %c2 = arith.constant 2 : index
    %17 = memref.load %arg2[%c2] : memref<12xf32, #tpu.memory_space<smem>>
    %18 = vector.extract_strided_slice %5 {offsets = [0, 5], sizes = [2, 16], strides = [1, 1]} : vector<2x24xf32> to vector<2x16xf32>
    %19 = vector.broadcast %17 : f32 to vector<2x16xf32>
    %20 = arith.mulf %19, %18 : vector<2x16xf32>
    %21 = arith.addf %16, %20 : vector<2x16xf32>
    %c3 = arith.constant 3 : index
    %22 = memref.load %arg2[%c3] : memref<12xf32, #tpu.memory_space<smem>>
    %23 = vector.extract_strided_slice %5 {offsets = [0, 2], sizes = [2, 16], strides = [1, 1]} : vector<2x24xf32> to vector<2x16xf32>
    %24 = vector.broadcast %22 : f32 to vector<2x16xf32>
    %25 = arith.mulf %24, %23 : vector<2x16xf32>
    %26 = arith.addf %21, %25 : vector<2x16xf32>
    %c4 = arith.constant 4 : index
    %27 = memref.load %arg2[%c4] : memref<12xf32, #tpu.memory_space<smem>>
    %28 = vector.extract_strided_slice %5 {offsets = [0, 4], sizes = [2, 16], strides = [1, 1]} : vector<2x24xf32> to vector<2x16xf32>
    %29 = vector.broadcast %27 : f32 to vector<2x16xf32>
    %30 = arith.mulf %29, %28 : vector<2x16xf32>
    %31 = arith.addf %26, %30 : vector<2x16xf32>
    %c5 = arith.constant 5 : index
    %32 = memref.load %arg2[%c5] : memref<12xf32, #tpu.memory_space<smem>>
    %33 = vector.extract_strided_slice %5 {offsets = [0, 6], sizes = [2, 16], strides = [1, 1]} : vector<2x24xf32> to vector<2x16xf32>
    %34 = vector.broadcast %32 : f32 to vector<2x16xf32>
    %35 = arith.mulf %34, %33 : vector<2x16xf32>
    %36 = arith.addf %31, %35 : vector<2x16xf32>
    %c6 = arith.constant 6 : index
    %37 = memref.load %arg2[%c6] : memref<12xf32, #tpu.memory_space<smem>>
    %38 = vector.extract_strided_slice %5 {offsets = [0, 1], sizes = [2, 16], strides = [1, 1]} : vector<2x24xf32> to vector<2x16xf32>
    %39 = vector.broadcast %37 : f32 to vector<2x16xf32>
    %40 = arith.mulf %39, %38 : vector<2x16xf32>
    %41 = arith.addf %36, %40 : vector<2x16xf32>
    %c7 = arith.constant 7 : index
    %42 = memref.load %arg2[%c7] : memref<12xf32, #tpu.memory_space<smem>>
    %43 = vector.extract_strided_slice %5 {offsets = [0, 4], sizes = [2, 16], strides = [1, 1]} : vector<2x24xf32> to vector<2x16xf32>
    %44 = vector.broadcast %42 : f32 to vector<2x16xf32>
    %45 = arith.mulf %44, %43 : vector<2x16xf32>
    %46 = arith.addf %41, %45 : vector<2x16xf32>
    %c8 = arith.constant 8 : index
    %47 = memref.load %arg2[%c8] : memref<12xf32, #tpu.memory_space<smem>>
    %48 = vector.extract_strided_slice %5 {offsets = [0, 7], sizes = [2, 16], strides = [1, 1]} : vector<2x24xf32> to vector<2x16xf32>
    %49 = vector.broadcast %47 : f32 to vector<2x16xf32>
    %50 = arith.mulf %49, %48 : vector<2x16xf32>
    %51 = arith.addf %46, %50 : vector<2x16xf32>
    %c9 = arith.constant 9 : index
    %52 = memref.load %arg2[%c9] : memref<12xf32, #tpu.memory_space<smem>>
    %53 = vector.extract_strided_slice %5 {offsets = [0, 0], sizes = [2, 16], strides = [1, 1]} : vector<2x24xf32> to vector<2x16xf32>
    %54 = vector.broadcast %52 : f32 to vector<2x16xf32>
    %55 = arith.mulf %54, %53 : vector<2x16xf32>
    %56 = arith.addf %51, %55 : vector<2x16xf32>
    %c10 = arith.constant 10 : index
    %57 = memref.load %arg2[%c10] : memref<12xf32, #tpu.memory_space<smem>>
    %58 = vector.extract_strided_slice %5 {offsets = [0, 4], sizes = [2, 16], strides = [1, 1]} : vector<2x24xf32> to vector<2x16xf32>
    %59 = vector.broadcast %57 : f32 to vector<2x16xf32>
    %60 = arith.mulf %59, %58 : vector<2x16xf32>
    %61 = arith.addf %56, %60 : vector<2x16xf32>
    %c11 = arith.constant 11 : index
    %62 = memref.load %arg2[%c11] : memref<12xf32, #tpu.memory_space<smem>>
    %63 = vector.extract_strided_slice %5 {offsets = [0, 8], sizes = [2, 16], strides = [1, 1]} : vector<2x24xf32> to vector<2x16xf32>
    %64 = vector.broadcast %62 : f32 to vector<2x16xf32>
    %65 = arith.mulf %64, %63 : vector<2x16xf32>
    %66 = arith.addf %61, %65 : vector<2x16xf32>
    %67 = arith.negf %66 : vector<2x16xf32>
    %68 = math.exp %67 : vector<2x16xf32>
    %cst_6 = arith.constant 1.000000e+00 : f32
    %69 = vector.broadcast %cst_6 : f32 to vector<2x16xf32>
    %70 = arith.addf %69, %68 : vector<2x16xf32>
    %71 = arith.divf %69, %70 : vector<2x16xf32>
    %72 = vector.extract_strided_slice %71 {offsets = [0, 0], sizes = [2, 1], strides = [1, 1]} : vector<2x16xf32> to vector<2x1xf32>
    %c0_7 = arith.constant 0 : index
    %c0_8 = arith.constant 0 : index
    %c0_9 = arith.constant 0 : index
    %73 = vector.load %arg1[%c0_7, %c0_8, %c0_9] : memref<2x16x256xf32, #tpu.memory_space<vmem>>, vector<2x1x256xf32>
    %74 = vector.shape_cast %73 : vector<2x1x256xf32> to vector<2x256xf32>
    %75 = vector.broadcast %72 : vector<2x1xf32> to vector<2x256xf32>
    %76 = arith.mulf %75, %74 : vector<2x256xf32>
    %77 = vector.extract_strided_slice %71 {offsets = [0, 1], sizes = [2, 1], strides = [1, 1]} : vector<2x16xf32> to vector<2x1xf32>
    %c0_10 = arith.constant 0 : index
    %c1_11 = arith.constant 1 : index
    %c0_12 = arith.constant 0 : index
    %78 = vector.load %arg1[%c0_10, %c1_11, %c0_12] : memref<2x16x256xf32, #tpu.memory_space<vmem>>, vector<2x1x256xf32>
    %79 = vector.shape_cast %78 : vector<2x1x256xf32> to vector<2x256xf32>
    %80 = vector.broadcast %77 : vector<2x1xf32> to vector<2x256xf32>
    %81 = arith.mulf %80, %79 : vector<2x256xf32>
    %82 = arith.maximumf %76, %81 : vector<2x256xf32>
    %83 = arith.addf %76, %81 : vector<2x256xf32>
    %84 = vector.extract_strided_slice %71 {offsets = [0, 2], sizes = [2, 1], strides = [1, 1]} : vector<2x16xf32> to vector<2x1xf32>
    %c0_13 = arith.constant 0 : index
    %c2_14 = arith.constant 2 : index
    %c0_15 = arith.constant 0 : index
    %85 = vector.load %arg1[%c0_13, %c2_14, %c0_15] : memref<2x16x256xf32, #tpu.memory_space<vmem>>, vector<2x1x256xf32>
    %86 = vector.shape_cast %85 : vector<2x1x256xf32> to vector<2x256xf32>
    %87 = vector.broadcast %84 : vector<2x1xf32> to vector<2x256xf32>
    %88 = arith.mulf %87, %86 : vector<2x256xf32>
    %89 = arith.maximumf %82, %88 : vector<2x256xf32>
    %90 = arith.addf %83, %88 : vector<2x256xf32>
    %91 = vector.extract_strided_slice %71 {offsets = [0, 3], sizes = [2, 1], strides = [1, 1]} : vector<2x16xf32> to vector<2x1xf32>
    %c0_16 = arith.constant 0 : index
    %c3_17 = arith.constant 3 : index
    %c0_18 = arith.constant 0 : index
    %92 = vector.load %arg1[%c0_16, %c3_17, %c0_18] : memref<2x16x256xf32, #tpu.memory_space<vmem>>, vector<2x1x256xf32>
    %93 = vector.shape_cast %92 : vector<2x1x256xf32> to vector<2x256xf32>
    %94 = vector.broadcast %91 : vector<2x1xf32> to vector<2x256xf32>
    %95 = arith.mulf %94, %93 : vector<2x256xf32>
    %96 = arith.maximumf %89, %95 : vector<2x256xf32>
    %97 = arith.addf %90, %95 : vector<2x256xf32>
    %98 = vector.extract_strided_slice %71 {offsets = [0, 4], sizes = [2, 1], strides = [1, 1]} : vector<2x16xf32> to vector<2x1xf32>
    %c0_19 = arith.constant 0 : index
    %c4_20 = arith.constant 4 : index
    %c0_21 = arith.constant 0 : index
    %99 = vector.load %arg1[%c0_19, %c4_20, %c0_21] : memref<2x16x256xf32, #tpu.memory_space<vmem>>, vector<2x1x256xf32>
    %100 = vector.shape_cast %99 : vector<2x1x256xf32> to vector<2x256xf32>
    %101 = vector.broadcast %98 : vector<2x1xf32> to vector<2x256xf32>
    %102 = arith.mulf %101, %100 : vector<2x256xf32>
    %103 = arith.maximumf %96, %102 : vector<2x256xf32>
    %104 = arith.addf %97, %102 : vector<2x256xf32>
    %105 = vector.extract_strided_slice %71 {offsets = [0, 5], sizes = [2, 1], strides = [1, 1]} : vector<2x16xf32> to vector<2x1xf32>
    %c0_22 = arith.constant 0 : index
    %c5_23 = arith.constant 5 : index
    %c0_24 = arith.constant 0 : index
    %106 = vector.load %arg1[%c0_22, %c5_23, %c0_24] : memref<2x16x256xf32, #tpu.memory_space<vmem>>, vector<2x1x256xf32>
    %107 = vector.shape_cast %106 : vector<2x1x256xf32> to vector<2x256xf32>
    %108 = vector.broadcast %105 : vector<2x1xf32> to vector<2x256xf32>
    %109 = arith.mulf %108, %107 : vector<2x256xf32>
    %110 = arith.maximumf %103, %109 : vector<2x256xf32>
    %111 = arith.addf %104, %109 : vector<2x256xf32>
    %112 = vector.extract_strided_slice %71 {offsets = [0, 6], sizes = [2, 1], strides = [1, 1]} : vector<2x16xf32> to vector<2x1xf32>
    %c0_25 = arith.constant 0 : index
    %c6_26 = arith.constant 6 : index
    %c0_27 = arith.constant 0 : index
    %113 = vector.load %arg1[%c0_25, %c6_26, %c0_27] : memref<2x16x256xf32, #tpu.memory_space<vmem>>, vector<2x1x256xf32>
    %114 = vector.shape_cast %113 : vector<2x1x256xf32> to vector<2x256xf32>
    %115 = vector.broadcast %112 : vector<2x1xf32> to vector<2x256xf32>
    %116 = arith.mulf %115, %114 : vector<2x256xf32>
    %117 = arith.maximumf %110, %116 : vector<2x256xf32>
    %118 = arith.addf %111, %116 : vector<2x256xf32>
    %119 = vector.extract_strided_slice %71 {offsets = [0, 7], sizes = [2, 1], strides = [1, 1]} : vector<2x16xf32> to vector<2x1xf32>
    %c0_28 = arith.constant 0 : index
    %c7_29 = arith.constant 7 : index
    %c0_30 = arith.constant 0 : index
    %120 = vector.load %arg1[%c0_28, %c7_29, %c0_30] : memref<2x16x256xf32, #tpu.memory_space<vmem>>, vector<2x1x256xf32>
    %121 = vector.shape_cast %120 : vector<2x1x256xf32> to vector<2x256xf32>
    %122 = vector.broadcast %119 : vector<2x1xf32> to vector<2x256xf32>
    %123 = arith.mulf %122, %121 : vector<2x256xf32>
    %124 = arith.maximumf %117, %123 : vector<2x256xf32>
    %125 = arith.addf %118, %123 : vector<2x256xf32>
    %126 = vector.extract_strided_slice %71 {offsets = [0, 8], sizes = [2, 1], strides = [1, 1]} : vector<2x16xf32> to vector<2x1xf32>
    %c0_31 = arith.constant 0 : index
    %c8_32 = arith.constant 8 : index
    %c0_33 = arith.constant 0 : index
    %127 = vector.load %arg1[%c0_31, %c8_32, %c0_33] : memref<2x16x256xf32, #tpu.memory_space<vmem>>, vector<2x1x256xf32>
    %128 = vector.shape_cast %127 : vector<2x1x256xf32> to vector<2x256xf32>
    %129 = vector.broadcast %126 : vector<2x1xf32> to vector<2x256xf32>
    %130 = arith.mulf %129, %128 : vector<2x256xf32>
    %131 = arith.maximumf %124, %130 : vector<2x256xf32>
    %132 = arith.addf %125, %130 : vector<2x256xf32>
    %133 = vector.extract_strided_slice %71 {offsets = [0, 9], sizes = [2, 1], strides = [1, 1]} : vector<2x16xf32> to vector<2x1xf32>
    %c0_34 = arith.constant 0 : index
    %c9_35 = arith.constant 9 : index
    %c0_36 = arith.constant 0 : index
    %134 = vector.load %arg1[%c0_34, %c9_35, %c0_36] : memref<2x16x256xf32, #tpu.memory_space<vmem>>, vector<2x1x256xf32>
    %135 = vector.shape_cast %134 : vector<2x1x256xf32> to vector<2x256xf32>
    %136 = vector.broadcast %133 : vector<2x1xf32> to vector<2x256xf32>
    %137 = arith.mulf %136, %135 : vector<2x256xf32>
    %138 = arith.maximumf %131, %137 : vector<2x256xf32>
    %139 = arith.addf %132, %137 : vector<2x256xf32>
    %140 = vector.extract_strided_slice %71 {offsets = [0, 10], sizes = [2, 1], strides = [1, 1]} : vector<2x16xf32> to vector<2x1xf32>
    %c0_37 = arith.constant 0 : index
    %c10_38 = arith.constant 10 : index
    %c0_39 = arith.constant 0 : index
    %141 = vector.load %arg1[%c0_37, %c10_38, %c0_39] : memref<2x16x256xf32, #tpu.memory_space<vmem>>, vector<2x1x256xf32>
    %142 = vector.shape_cast %141 : vector<2x1x256xf32> to vector<2x256xf32>
    %143 = vector.broadcast %140 : vector<2x1xf32> to vector<2x256xf32>
    %144 = arith.mulf %143, %142 : vector<2x256xf32>
    %145 = arith.maximumf %138, %144 : vector<2x256xf32>
    %146 = arith.addf %139, %144 : vector<2x256xf32>
    %147 = vector.extract_strided_slice %71 {offsets = [0, 11], sizes = [2, 1], strides = [1, 1]} : vector<2x16xf32> to vector<2x1xf32>
    %c0_40 = arith.constant 0 : index
    %c11_41 = arith.constant 11 : index
    %c0_42 = arith.constant 0 : index
    %148 = vector.load %arg1[%c0_40, %c11_41, %c0_42] : memref<2x16x256xf32, #tpu.memory_space<vmem>>, vector<2x1x256xf32>
    %149 = vector.shape_cast %148 : vector<2x1x256xf32> to vector<2x256xf32>
    %150 = vector.broadcast %147 : vector<2x1xf32> to vector<2x256xf32>
    %151 = arith.mulf %150, %149 : vector<2x256xf32>
    %152 = arith.maximumf %145, %151 : vector<2x256xf32>
    %153 = arith.addf %146, %151 : vector<2x256xf32>
    %154 = vector.extract_strided_slice %71 {offsets = [0, 12], sizes = [2, 1], strides = [1, 1]} : vector<2x16xf32> to vector<2x1xf32>
    %c0_43 = arith.constant 0 : index
    %c12 = arith.constant 12 : index
    %c0_44 = arith.constant 0 : index
    %155 = vector.load %arg1[%c0_43, %c12, %c0_44] : memref<2x16x256xf32, #tpu.memory_space<vmem>>, vector<2x1x256xf32>
    %156 = vector.shape_cast %155 : vector<2x1x256xf32> to vector<2x256xf32>
    %157 = vector.broadcast %154 : vector<2x1xf32> to vector<2x256xf32>
    %158 = arith.mulf %157, %156 : vector<2x256xf32>
    %159 = arith.maximumf %152, %158 : vector<2x256xf32>
    %160 = arith.addf %153, %158 : vector<2x256xf32>
    %161 = vector.extract_strided_slice %71 {offsets = [0, 13], sizes = [2, 1], strides = [1, 1]} : vector<2x16xf32> to vector<2x1xf32>
    %c0_45 = arith.constant 0 : index
    %c13 = arith.constant 13 : index
    %c0_46 = arith.constant 0 : index
    %162 = vector.load %arg1[%c0_45, %c13, %c0_46] : memref<2x16x256xf32, #tpu.memory_space<vmem>>, vector<2x1x256xf32>
    %163 = vector.shape_cast %162 : vector<2x1x256xf32> to vector<2x256xf32>
    %164 = vector.broadcast %161 : vector<2x1xf32> to vector<2x256xf32>
    %165 = arith.mulf %164, %163 : vector<2x256xf32>
    %166 = arith.maximumf %159, %165 : vector<2x256xf32>
    %167 = arith.addf %160, %165 : vector<2x256xf32>
    %168 = vector.extract_strided_slice %71 {offsets = [0, 14], sizes = [2, 1], strides = [1, 1]} : vector<2x16xf32> to vector<2x1xf32>
    %c0_47 = arith.constant 0 : index
    %c14 = arith.constant 14 : index
    %c0_48 = arith.constant 0 : index
    %169 = vector.load %arg1[%c0_47, %c14, %c0_48] : memref<2x16x256xf32, #tpu.memory_space<vmem>>, vector<2x1x256xf32>
    %170 = vector.shape_cast %169 : vector<2x1x256xf32> to vector<2x256xf32>
    %171 = vector.broadcast %168 : vector<2x1xf32> to vector<2x256xf32>
    %172 = arith.mulf %171, %170 : vector<2x256xf32>
    %173 = arith.maximumf %166, %172 : vector<2x256xf32>
    %174 = arith.addf %167, %172 : vector<2x256xf32>
    %175 = vector.extract_strided_slice %71 {offsets = [0, 15], sizes = [2, 1], strides = [1, 1]} : vector<2x16xf32> to vector<2x1xf32>
    %c0_49 = arith.constant 0 : index
    %c15 = arith.constant 15 : index
    %c0_50 = arith.constant 0 : index
    %176 = vector.load %arg1[%c0_49, %c15, %c0_50] : memref<2x16x256xf32, #tpu.memory_space<vmem>>, vector<2x1x256xf32>
    %177 = vector.shape_cast %176 : vector<2x1x256xf32> to vector<2x256xf32>
    %178 = vector.broadcast %175 : vector<2x1xf32> to vector<2x256xf32>
    %179 = arith.mulf %178, %177 : vector<2x256xf32>
    %180 = arith.maximumf %173, %179 : vector<2x256xf32>
    %181 = arith.addf %174, %179 : vector<2x256xf32>
    %cst_51 = arith.constant 6.250000e-02 : f32
    %182 = vector.broadcast %cst_51 : f32 to vector<2x256xf32>
    %183 = arith.mulf %181, %182 : vector<2x256xf32>
    %cst_52 = arith.constant 0.000000e+00 : f32
    %184 = vector.broadcast %cst_52 : f32 to vector<2x68xf32>
    %185 = tpu.concatenate %184, %180, %184 in 1 : vector<2x68xf32>, vector<2x256xf32>, vector<2x68xf32> -> vector<2x392xf32>
    %186 = tpu.concatenate %184, %183, %184 in 1 : vector<2x68xf32>, vector<2x256xf32>, vector<2x68xf32> -> vector<2x392xf32>
    %187 = tpu.iota {dimensions = array<i32: 1>} : vector<1x256xi32>
    %c16_i32 = arith.constant 16 : i32
    %c0_i32 = arith.constant 0 : i32
    %188 = arith.cmpi eq, %c16_i32, %c0_i32 : i32
    %c1_i32 = arith.constant 1 : i32
    %189 = arith.select %188, %c1_i32, %c16_i32 : i32
    %190 = vector.broadcast %189 : i32 to vector<1x256xi32>
    %191 = arith.remsi %187, %190 : vector<1x256xi32>
    %c0_i32_53 = arith.constant 0 : i32
    %192 = vector.broadcast %c0_i32_53 : i32 to vector<1x256xi32>
    %193 = arith.cmpi ne, %191, %192 : vector<1x256xi32>
    %c0_i32_54 = arith.constant 0 : i32
    %194 = vector.broadcast %c0_i32_54 : i32 to vector<1x256xi32>
    %195 = arith.cmpi slt, %191, %194 : vector<1x256xi32>
    %c0_i32_55 = arith.constant 0 : i32
    %196 = arith.cmpi slt, %189, %c0_i32_55 : i32
    %197 = vector.broadcast %196 : i1 to vector<1x256xi1>
    %198 = vector.broadcast %197 : vector<1x256xi1> to vector<1x256xi1>
    %199 = arith.xori %195, %198 : vector<1x256xi1>
    %200 = arith.andi %199, %193 : vector<1x256xi1>
    %201 = vector.broadcast %189 : i32 to vector<1x256xi32>
    %202 = arith.addi %191, %201 : vector<1x256xi32>
    %203 = arith.select %200, %202, %191 : vector<1x256xi1>, vector<1x256xi32>
    %c4_56 = arith.constant 4 : index
    %204 = memref.load %arg3[%c4_56] : memref<72xf32, #tpu.memory_space<smem>>
    %c13_57 = arith.constant 13 : index
    %205 = memref.load %arg3[%c13_57] : memref<72xf32, #tpu.memory_space<smem>>
    %c22 = arith.constant 22 : index
    %206 = memref.load %arg3[%c22] : memref<72xf32, #tpu.memory_space<smem>>
    %207 = arith.addf %204, %206 : f32
    %c31 = arith.constant 31 : index
    %208 = memref.load %arg3[%c31] : memref<72xf32, #tpu.memory_space<smem>>
    %209 = arith.addf %205, %208 : f32
    %c40 = arith.constant 40 : index
    %210 = memref.load %arg3[%c40] : memref<72xf32, #tpu.memory_space<smem>>
    %211 = arith.addf %207, %210 : f32
    %c49 = arith.constant 49 : index
    %212 = memref.load %arg3[%c49] : memref<72xf32, #tpu.memory_space<smem>>
    %213 = arith.addf %209, %212 : f32
    %c58 = arith.constant 58 : index
    %214 = memref.load %arg3[%c58] : memref<72xf32, #tpu.memory_space<smem>>
    %215 = arith.addf %211, %214 : f32
    %c67 = arith.constant 67 : index
    %216 = memref.load %arg3[%c67] : memref<72xf32, #tpu.memory_space<smem>>
    %217 = arith.addf %213, %216 : f32
    %218 = vector.broadcast %215 : f32 to vector<2x256xf32>
    %219 = arith.mulf %218, %180 : vector<2x256xf32>
    %220 = vector.broadcast %217 : f32 to vector<2x256xf32>
    %221 = arith.mulf %220, %183 : vector<2x256xf32>
    %222 = arith.addf %219, %221 : vector<2x256xf32>
    %c0_58 = arith.constant 0 : index
    %223 = memref.load %arg4[%c0_58] : memref<1xf32, #tpu.memory_space<smem>>
    %224 = vector.broadcast %223 : f32 to vector<2x256xf32>
    %225 = arith.addf %222, %224 : vector<2x256xf32>
    %c0_59 = arith.constant 0 : index
    %226 = memref.load %arg3[%c0_59] : memref<72xf32, #tpu.memory_space<smem>>
    %227 = vector.extract_strided_slice %185 {offsets = [0, 51], sizes = [2, 256], strides = [1, 1]} : vector<2x392xf32> to vector<2x256xf32>
    %228 = vector.broadcast %226 : f32 to vector<2x256xf32>
    %229 = arith.mulf %228, %227 : vector<2x256xf32>
    %c9_60 = arith.constant 9 : index
    %230 = memref.load %arg3[%c9_60] : memref<72xf32, #tpu.memory_space<smem>>
    %231 = vector.extract_strided_slice %186 {offsets = [0, 51], sizes = [2, 256], strides = [1, 1]} : vector<2x392xf32> to vector<2x256xf32>
    %232 = vector.broadcast %230 : f32 to vector<2x256xf32>
    %233 = arith.mulf %232, %231 : vector<2x256xf32>
    %234 = arith.addf %229, %233 : vector<2x256xf32>
    %c3_61 = arith.constant 3 : index
    %235 = memref.load %arg3[%c3_61] : memref<72xf32, #tpu.memory_space<smem>>
    %236 = vector.extract_strided_slice %185 {offsets = [0, 67], sizes = [2, 256], strides = [1, 1]} : vector<2x392xf32> to vector<2x256xf32>
    %237 = vector.broadcast %235 : f32 to vector<2x256xf32>
    %238 = arith.mulf %237, %236 : vector<2x256xf32>
    %c12_62 = arith.constant 12 : index
    %239 = memref.load %arg3[%c12_62] : memref<72xf32, #tpu.memory_space<smem>>
    %240 = vector.extract_strided_slice %186 {offsets = [0, 67], sizes = [2, 256], strides = [1, 1]} : vector<2x392xf32> to vector<2x256xf32>
    %241 = vector.broadcast %239 : f32 to vector<2x256xf32>
    %242 = arith.mulf %241, %240 : vector<2x256xf32>
    %243 = arith.addf %238, %242 : vector<2x256xf32>
    %244 = arith.addf %234, %243 : vector<2x256xf32>
    %c6_63 = arith.constant 6 : index
    %245 = memref.load %arg3[%c6_63] : memref<72xf32, #tpu.memory_space<smem>>
    %246 = vector.extract_strided_slice %185 {offsets = [0, 83], sizes = [2, 256], strides = [1, 1]} : vector<2x392xf32> to vector<2x256xf32>
    %247 = vector.broadcast %245 : f32 to vector<2x256xf32>
    %248 = arith.mulf %247, %246 : vector<2x256xf32>
    %c15_64 = arith.constant 15 : index
    %249 = memref.load %arg3[%c15_64] : memref<72xf32, #tpu.memory_space<smem>>
    %250 = vector.extract_strided_slice %186 {offsets = [0, 83], sizes = [2, 256], strides = [1, 1]} : vector<2x392xf32> to vector<2x256xf32>
    %251 = vector.broadcast %249 : f32 to vector<2x256xf32>
    %252 = arith.mulf %251, %250 : vector<2x256xf32>
    %253 = arith.addf %248, %252 : vector<2x256xf32>
    %254 = arith.addf %244, %253 : vector<2x256xf32>
    %c-1_i32 = arith.constant -1 : i32
    %255 = vector.broadcast %c-1_i32 : i32 to vector<1x256xi32>
    %256 = arith.addi %203, %255 : vector<1x256xi32>
    %c0_i32_65 = arith.constant 0 : i32
    %257 = vector.broadcast %c0_i32_65 : i32 to vector<1x256xi32>
    %258 = arith.cmpi sge, %256, %257 : vector<1x256xi32>
    %c-1_i32_66 = arith.constant -1 : i32
    %259 = vector.broadcast %c-1_i32_66 : i32 to vector<1x256xi32>
    %260 = arith.addi %203, %259 : vector<1x256xi32>
    %c16_i32_67 = arith.constant 16 : i32
    %261 = vector.broadcast %c16_i32_67 : i32 to vector<1x256xi32>
    %262 = arith.cmpi slt, %260, %261 : vector<1x256xi32>
    %263 = arith.andi %258, %262 : vector<1x256xi1>
    %cst_68 = arith.constant 0.000000e+00 : f32
    %264 = vector.shape_cast %263 : vector<1x256xi1> to vector<1x256xi1>
    %265 = vector.broadcast %264 : vector<1x256xi1> to vector<2x256xi1>
    %266 = vector.broadcast %cst_68 : f32 to vector<2x256xf32>
    %267 = arith.select %265, %254, %266 : vector<2x256xi1>, vector<2x256xf32>
    %268 = arith.addf %225, %267 : vector<2x256xf32>
    %c1_69 = arith.constant 1 : index
    %269 = memref.load %arg3[%c1_69] : memref<72xf32, #tpu.memory_space<smem>>
    %270 = vector.extract_strided_slice %185 {offsets = [0, 52], sizes = [2, 256], strides = [1, 1]} : vector<2x392xf32> to vector<2x256xf32>
    %271 = vector.broadcast %269 : f32 to vector<2x256xf32>
    %272 = arith.mulf %271, %270 : vector<2x256xf32>
    %c10_70 = arith.constant 10 : index
    %273 = memref.load %arg3[%c10_70] : memref<72xf32, #tpu.memory_space<smem>>
    %274 = vector.extract_strided_slice %186 {offsets = [0, 52], sizes = [2, 256], strides = [1, 1]} : vector<2x392xf32> to vector<2x256xf32>
    %275 = vector.broadcast %273 : f32 to vector<2x256xf32>
    %276 = arith.mulf %275, %274 : vector<2x256xf32>
    %277 = arith.addf %272, %276 : vector<2x256xf32>
    %c7_71 = arith.constant 7 : index
    %278 = memref.load %arg3[%c7_71] : memref<72xf32, #tpu.memory_space<smem>>
    %279 = vector.extract_strided_slice %185 {offsets = [0, 84], sizes = [2, 256], strides = [1, 1]} : vector<2x392xf32> to vector<2x256xf32>
    %280 = vector.broadcast %278 : f32 to vector<2x256xf32>
    %281 = arith.mulf %280, %279 : vector<2x256xf32>
    %c16 = arith.constant 16 : index
    %282 = memref.load %arg3[%c16] : memref<72xf32, #tpu.memory_space<smem>>
    %283 = vector.extract_strided_slice %186 {offsets = [0, 84], sizes = [2, 256], strides = [1, 1]} : vector<2x392xf32> to vector<2x256xf32>
    %284 = vector.broadcast %282 : f32 to vector<2x256xf32>
    %285 = arith.mulf %284, %283 : vector<2x256xf32>
    %286 = arith.addf %281, %285 : vector<2x256xf32>
    %287 = arith.addf %277, %286 : vector<2x256xf32>
    %288 = arith.addf %268, %287 : vector<2x256xf32>
    %c2_72 = arith.constant 2 : index
    %289 = memref.load %arg3[%c2_72] : memref<72xf32, #tpu.memory_space<smem>>
    %290 = vector.extract_strided_slice %185 {offsets = [0, 53], sizes = [2, 256], strides = [1, 1]} : vector<2x392xf32> to vector<2x256xf32>
    %291 = vector.broadcast %289 : f32 to vector<2x256xf32>
    %292 = arith.mulf %291, %290 : vector<2x256xf32>
    %c11_73 = arith.constant 11 : index
    %293 = memref.load %arg3[%c11_73] : memref<72xf32, #tpu.memory_space<smem>>
    %294 = vector.extract_strided_slice %186 {offsets = [0, 53], sizes = [2, 256], strides = [1, 1]} : vector<2x392xf32> to vector<2x256xf32>
    %295 = vector.broadcast %293 : f32 to vector<2x256xf32>
    %296 = arith.mulf %295, %294 : vector<2x256xf32>
    %297 = arith.addf %292, %296 : vector<2x256xf32>
    %c5_74 = arith.constant 5 : index
    %298 = memref.load %arg3[%c5_74] : memref<72xf32, #tpu.memory_space<smem>>
    %299 = vector.extract_strided_slice %185 {offsets = [0, 69], sizes = [2, 256], strides = [1, 1]} : vector<2x392xf32> to vector<2x256xf32>
    %300 = vector.broadcast %298 : f32 to vector<2x256xf32>
    %301 = arith.mulf %300, %299 : vector<2x256xf32>
    %c14_75 = arith.constant 14 : index
    %302 = memref.load %arg3[%c14_75] : memref<72xf32, #tpu.memory_space<smem>>
    %303 = vector.extract_strided_slice %186 {offsets = [0, 69], sizes = [2, 256], strides = [1, 1]} : vector<2x392xf32> to vector<2x256xf32>
    %304 = vector.broadcast %302 : f32 to vector<2x256xf32>
    %305 = arith.mulf %304, %303 : vector<2x256xf32>
    %306 = arith.addf %301, %305 : vector<2x256xf32>
    %307 = arith.addf %297, %306 : vector<2x256xf32>
    %c8_76 = arith.constant 8 : index
    %308 = memref.load %arg3[%c8_76] : memref<72xf32, #tpu.memory_space<smem>>
    %309 = vector.extract_strided_slice %185 {offsets = [0, 85], sizes = [2, 256], strides = [1, 1]} : vector<2x392xf32> to vector<2x256xf32>
    %310 = vector.broadcast %308 : f32 to vector<2x256xf32>
    %311 = arith.mulf %310, %309 : vector<2x256xf32>
    %c17 = arith.constant 17 : index
    %312 = memref.load %arg3[%c17] : memref<72xf32, #tpu.memory_space<smem>>
    %313 = vector.extract_strided_slice %186 {offsets = [0, 85], sizes = [2, 256], strides = [1, 1]} : vector<2x392xf32> to vector<2x256xf32>
    %314 = vector.broadcast %312 : f32 to vector<2x256xf32>
    %315 = arith.mulf %314, %313 : vector<2x256xf32>
    %316 = arith.addf %311, %315 : vector<2x256xf32>
    %317 = arith.addf %307, %316 : vector<2x256xf32>
    %c1_i32_77 = arith.constant 1 : i32
    %318 = vector.broadcast %c1_i32_77 : i32 to vector<1x256xi32>
    %319 = arith.addi %203, %318 : vector<1x256xi32>
    %c0_i32_78 = arith.constant 0 : i32
    %320 = vector.broadcast %c0_i32_78 : i32 to vector<1x256xi32>
    %321 = arith.cmpi sge, %319, %320 : vector<1x256xi32>
    %c1_i32_79 = arith.constant 1 : i32
    %322 = vector.broadcast %c1_i32_79 : i32 to vector<1x256xi32>
    %323 = arith.addi %203, %322 : vector<1x256xi32>
    %c16_i32_80 = arith.constant 16 : i32
    %324 = vector.broadcast %c16_i32_80 : i32 to vector<1x256xi32>
    %325 = arith.cmpi slt, %323, %324 : vector<1x256xi32>
    %326 = arith.andi %321, %325 : vector<1x256xi1>
    %cst_81 = arith.constant 0.000000e+00 : f32
    %327 = vector.shape_cast %326 : vector<1x256xi1> to vector<1x256xi1>
    %328 = vector.broadcast %327 : vector<1x256xi1> to vector<2x256xi1>
    %329 = vector.broadcast %cst_81 : f32 to vector<2x256xf32>
    %330 = arith.select %328, %317, %329 : vector<2x256xi1>, vector<2x256xf32>
    %331 = arith.addf %288, %330 : vector<2x256xf32>
    %c18 = arith.constant 18 : index
    %332 = memref.load %arg3[%c18] : memref<72xf32, #tpu.memory_space<smem>>
    %333 = vector.extract_strided_slice %185 {offsets = [0, 34], sizes = [2, 256], strides = [1, 1]} : vector<2x392xf32> to vector<2x256xf32>
    %334 = vector.broadcast %332 : f32 to vector<2x256xf32>
    %335 = arith.mulf %334, %333 : vector<2x256xf32>
    %c27 = arith.constant 27 : index
    %336 = memref.load %arg3[%c27] : memref<72xf32, #tpu.memory_space<smem>>
    %337 = vector.extract_strided_slice %186 {offsets = [0, 34], sizes = [2, 256], strides = [1, 1]} : vector<2x392xf32> to vector<2x256xf32>
    %338 = vector.broadcast %336 : f32 to vector<2x256xf32>
    %339 = arith.mulf %338, %337 : vector<2x256xf32>
    %340 = arith.addf %335, %339 : vector<2x256xf32>
    %c21 = arith.constant 21 : index
    %341 = memref.load %arg3[%c21] : memref<72xf32, #tpu.memory_space<smem>>
    %342 = vector.extract_strided_slice %185 {offsets = [0, 66], sizes = [2, 256], strides = [1, 1]} : vector<2x392xf32> to vector<2x256xf32>
    %343 = vector.broadcast %341 : f32 to vector<2x256xf32>
    %344 = arith.mulf %343, %342 : vector<2x256xf32>
    %c30 = arith.constant 30 : index
    %345 = memref.load %arg3[%c30] : memref<72xf32, #tpu.memory_space<smem>>
    %346 = vector.extract_strided_slice %186 {offsets = [0, 66], sizes = [2, 256], strides = [1, 1]} : vector<2x392xf32> to vector<2x256xf32>
    %347 = vector.broadcast %345 : f32 to vector<2x256xf32>
    %348 = arith.mulf %347, %346 : vector<2x256xf32>
    %349 = arith.addf %344, %348 : vector<2x256xf32>
    %350 = arith.addf %340, %349 : vector<2x256xf32>
    %c24 = arith.constant 24 : index
    %351 = memref.load %arg3[%c24] : memref<72xf32, #tpu.memory_space<smem>>
    %352 = vector.extract_strided_slice %185 {offsets = [0, 98], sizes = [2, 256], strides = [1, 1]} : vector<2x392xf32> to vector<2x256xf32>
    %353 = vector.broadcast %351 : f32 to vector<2x256xf32>
    %354 = arith.mulf %353, %352 : vector<2x256xf32>
    %c33 = arith.constant 33 : index
    %355 = memref.load %arg3[%c33] : memref<72xf32, #tpu.memory_space<smem>>
    %356 = vector.extract_strided_slice %186 {offsets = [0, 98], sizes = [2, 256], strides = [1, 1]} : vector<2x392xf32> to vector<2x256xf32>
    %357 = vector.broadcast %355 : f32 to vector<2x256xf32>
    %358 = arith.mulf %357, %356 : vector<2x256xf32>
    %359 = arith.addf %354, %358 : vector<2x256xf32>
    %360 = arith.addf %350, %359 : vector<2x256xf32>
    %c-2_i32 = arith.constant -2 : i32
    %361 = vector.broadcast %c-2_i32 : i32 to vector<1x256xi32>
    %362 = arith.addi %203, %361 : vector<1x256xi32>
    %c0_i32_82 = arith.constant 0 : i32
    %363 = vector.broadcast %c0_i32_82 : i32 to vector<1x256xi32>
    %364 = arith.cmpi sge, %362, %363 : vector<1x256xi32>
    %c-2_i32_83 = arith.constant -2 : i32
    %365 = vector.broadcast %c-2_i32_83 : i32 to vector<1x256xi32>
    %366 = arith.addi %203, %365 : vector<1x256xi32>
    %c16_i32_84 = arith.constant 16 : i32
    %367 = vector.broadcast %c16_i32_84 : i32 to vector<1x256xi32>
    %368 = arith.cmpi slt, %366, %367 : vector<1x256xi32>
    %369 = arith.andi %364, %368 : vector<1x256xi1>
    %cst_85 = arith.constant 0.000000e+00 : f32
    %370 = vector.shape_cast %369 : vector<1x256xi1> to vector<1x256xi1>
    %371 = vector.broadcast %370 : vector<1x256xi1> to vector<2x256xi1>
    %372 = vector.broadcast %cst_85 : f32 to vector<2x256xf32>
    %373 = arith.select %371, %360, %372 : vector<2x256xi1>, vector<2x256xf32>
    %374 = arith.addf %331, %373 : vector<2x256xf32>
    %c19 = arith.constant 19 : index
    %375 = memref.load %arg3[%c19] : memref<72xf32, #tpu.memory_space<smem>>
    %376 = vector.extract_strided_slice %185 {offsets = [0, 36], sizes = [2, 256], strides = [1, 1]} : vector<2x392xf32> to vector<2x256xf32>
    %377 = vector.broadcast %375 : f32 to vector<2x256xf32>
    %378 = arith.mulf %377, %376 : vector<2x256xf32>
    %c28 = arith.constant 28 : index
    %379 = memref.load %arg3[%c28] : memref<72xf32, #tpu.memory_space<smem>>
    %380 = vector.extract_strided_slice %186 {offsets = [0, 36], sizes = [2, 256], strides = [1, 1]} : vector<2x392xf32> to vector<2x256xf32>
    %381 = vector.broadcast %379 : f32 to vector<2x256xf32>
    %382 = arith.mulf %381, %380 : vector<2x256xf32>
    %383 = arith.addf %378, %382 : vector<2x256xf32>
    %c25 = arith.constant 25 : index
    %384 = memref.load %arg3[%c25] : memref<72xf32, #tpu.memory_space<smem>>
    %385 = vector.extract_strided_slice %185 {offsets = [0, 100], sizes = [2, 256], strides = [1, 1]} : vector<2x392xf32> to vector<2x256xf32>
    %386 = vector.broadcast %384 : f32 to vector<2x256xf32>
    %387 = arith.mulf %386, %385 : vector<2x256xf32>
    %c34 = arith.constant 34 : index
    %388 = memref.load %arg3[%c34] : memref<72xf32, #tpu.memory_space<smem>>
    %389 = vector.extract_strided_slice %186 {offsets = [0, 100], sizes = [2, 256], strides = [1, 1]} : vector<2x392xf32> to vector<2x256xf32>
    %390 = vector.broadcast %388 : f32 to vector<2x256xf32>
    %391 = arith.mulf %390, %389 : vector<2x256xf32>
    %392 = arith.addf %387, %391 : vector<2x256xf32>
    %393 = arith.addf %383, %392 : vector<2x256xf32>
    %394 = arith.addf %374, %393 : vector<2x256xf32>
    %c20 = arith.constant 20 : index
    %395 = memref.load %arg3[%c20] : memref<72xf32, #tpu.memory_space<smem>>
    %396 = vector.extract_strided_slice %185 {offsets = [0, 38], sizes = [2, 256], strides = [1, 1]} : vector<2x392xf32> to vector<2x256xf32>
    %397 = vector.broadcast %395 : f32 to vector<2x256xf32>
    %398 = arith.mulf %397, %396 : vector<2x256xf32>
    %c29 = arith.constant 29 : index
    %399 = memref.load %arg3[%c29] : memref<72xf32, #tpu.memory_space<smem>>
    %400 = vector.extract_strided_slice %186 {offsets = [0, 38], sizes = [2, 256], strides = [1, 1]} : vector<2x392xf32> to vector<2x256xf32>
    %401 = vector.broadcast %399 : f32 to vector<2x256xf32>
    %402 = arith.mulf %401, %400 : vector<2x256xf32>
    %403 = arith.addf %398, %402 : vector<2x256xf32>
    %c23 = arith.constant 23 : index
    %404 = memref.load %arg3[%c23] : memref<72xf32, #tpu.memory_space<smem>>
    %405 = vector.extract_strided_slice %185 {offsets = [0, 70], sizes = [2, 256], strides = [1, 1]} : vector<2x392xf32> to vector<2x256xf32>
    %406 = vector.broadcast %404 : f32 to vector<2x256xf32>
    %407 = arith.mulf %406, %405 : vector<2x256xf32>
    %c32 = arith.constant 32 : index
    %408 = memref.load %arg3[%c32] : memref<72xf32, #tpu.memory_space<smem>>
    %409 = vector.extract_strided_slice %186 {offsets = [0, 70], sizes = [2, 256], strides = [1, 1]} : vector<2x392xf32> to vector<2x256xf32>
    %410 = vector.broadcast %408 : f32 to vector<2x256xf32>
    %411 = arith.mulf %410, %409 : vector<2x256xf32>
    %412 = arith.addf %407, %411 : vector<2x256xf32>
    %413 = arith.addf %403, %412 : vector<2x256xf32>
    %c26 = arith.constant 26 : index
    %414 = memref.load %arg3[%c26] : memref<72xf32, #tpu.memory_space<smem>>
    %415 = vector.extract_strided_slice %185 {offsets = [0, 102], sizes = [2, 256], strides = [1, 1]} : vector<2x392xf32> to vector<2x256xf32>
    %416 = vector.broadcast %414 : f32 to vector<2x256xf32>
    %417 = arith.mulf %416, %415 : vector<2x256xf32>
    %c35 = arith.constant 35 : index
    %418 = memref.load %arg3[%c35] : memref<72xf32, #tpu.memory_space<smem>>
    %419 = vector.extract_strided_slice %186 {offsets = [0, 102], sizes = [2, 256], strides = [1, 1]} : vector<2x392xf32> to vector<2x256xf32>
    %420 = vector.broadcast %418 : f32 to vector<2x256xf32>
    %421 = arith.mulf %420, %419 : vector<2x256xf32>
    %422 = arith.addf %417, %421 : vector<2x256xf32>
    %423 = arith.addf %413, %422 : vector<2x256xf32>
    %c2_i32 = arith.constant 2 : i32
    %424 = vector.broadcast %c2_i32 : i32 to vector<1x256xi32>
    %425 = arith.addi %203, %424 : vector<1x256xi32>
    %c0_i32_86 = arith.constant 0 : i32
    %426 = vector.broadcast %c0_i32_86 : i32 to vector<1x256xi32>
    %427 = arith.cmpi sge, %425, %426 : vector<1x256xi32>
    %c2_i32_87 = arith.constant 2 : i32
    %428 = vector.broadcast %c2_i32_87 : i32 to vector<1x256xi32>
    %429 = arith.addi %203, %428 : vector<1x256xi32>
    %c16_i32_88 = arith.constant 16 : i32
    %430 = vector.broadcast %c16_i32_88 : i32 to vector<1x256xi32>
    %431 = arith.cmpi slt, %429, %430 : vector<1x256xi32>
    %432 = arith.andi %427, %431 : vector<1x256xi1>
    %cst_89 = arith.constant 0.000000e+00 : f32
    %433 = vector.shape_cast %432 : vector<1x256xi1> to vector<1x256xi1>
    %434 = vector.broadcast %433 : vector<1x256xi1> to vector<2x256xi1>
    %435 = vector.broadcast %cst_89 : f32 to vector<2x256xf32>
    %436 = arith.select %434, %423, %435 : vector<2x256xi1>, vector<2x256xf32>
    %437 = arith.addf %394, %436 : vector<2x256xf32>
    %c36 = arith.constant 36 : index
    %438 = memref.load %arg3[%c36] : memref<72xf32, #tpu.memory_space<smem>>
    %439 = vector.extract_strided_slice %185 {offsets = [0, 17], sizes = [2, 256], strides = [1, 1]} : vector<2x392xf32> to vector<2x256xf32>
    %440 = vector.broadcast %438 : f32 to vector<2x256xf32>
    %441 = arith.mulf %440, %439 : vector<2x256xf32>
    %c45 = arith.constant 45 : index
    %442 = memref.load %arg3[%c45] : memref<72xf32, #tpu.memory_space<smem>>
    %443 = vector.extract_strided_slice %186 {offsets = [0, 17], sizes = [2, 256], strides = [1, 1]} : vector<2x392xf32> to vector<2x256xf32>
    %444 = vector.broadcast %442 : f32 to vector<2x256xf32>
    %445 = arith.mulf %444, %443 : vector<2x256xf32>
    %446 = arith.addf %441, %445 : vector<2x256xf32>
    %c39 = arith.constant 39 : index
    %447 = memref.load %arg3[%c39] : memref<72xf32, #tpu.memory_space<smem>>
    %448 = vector.extract_strided_slice %185 {offsets = [0, 65], sizes = [2, 256], strides = [1, 1]} : vector<2x392xf32> to vector<2x256xf32>
    %449 = vector.broadcast %447 : f32 to vector<2x256xf32>
    %450 = arith.mulf %449, %448 : vector<2x256xf32>
    %c48 = arith.constant 48 : index
    %451 = memref.load %arg3[%c48] : memref<72xf32, #tpu.memory_space<smem>>
    %452 = vector.extract_strided_slice %186 {offsets = [0, 65], sizes = [2, 256], strides = [1, 1]} : vector<2x392xf32> to vector<2x256xf32>
    %453 = vector.broadcast %451 : f32 to vector<2x256xf32>
    %454 = arith.mulf %453, %452 : vector<2x256xf32>
    %455 = arith.addf %450, %454 : vector<2x256xf32>
    %456 = arith.addf %446, %455 : vector<2x256xf32>
    %c42 = arith.constant 42 : index
    %457 = memref.load %arg3[%c42] : memref<72xf32, #tpu.memory_space<smem>>
    %458 = vector.extract_strided_slice %185 {offsets = [0, 113], sizes = [2, 256], strides = [1, 1]} : vector<2x392xf32> to vector<2x256xf32>
    %459 = vector.broadcast %457 : f32 to vector<2x256xf32>
    %460 = arith.mulf %459, %458 : vector<2x256xf32>
    %c51 = arith.constant 51 : index
    %461 = memref.load %arg3[%c51] : memref<72xf32, #tpu.memory_space<smem>>
    %462 = vector.extract_strided_slice %186 {offsets = [0, 113], sizes = [2, 256], strides = [1, 1]} : vector<2x392xf32> to vector<2x256xf32>
    %463 = vector.broadcast %461 : f32 to vector<2x256xf32>
    %464 = arith.mulf %463, %462 : vector<2x256xf32>
    %465 = arith.addf %460, %464 : vector<2x256xf32>
    %466 = arith.addf %456, %465 : vector<2x256xf32>
    %c-3_i32 = arith.constant -3 : i32
    %467 = vector.broadcast %c-3_i32 : i32 to vector<1x256xi32>
    %468 = arith.addi %203, %467 : vector<1x256xi32>
    %c0_i32_90 = arith.constant 0 : i32
    %469 = vector.broadcast %c0_i32_90 : i32 to vector<1x256xi32>
    %470 = arith.cmpi sge, %468, %469 : vector<1x256xi32>
    %c-3_i32_91 = arith.constant -3 : i32
    %471 = vector.broadcast %c-3_i32_91 : i32 to vector<1x256xi32>
    %472 = arith.addi %203, %471 : vector<1x256xi32>
    %c16_i32_92 = arith.constant 16 : i32
    %473 = vector.broadcast %c16_i32_92 : i32 to vector<1x256xi32>
    %474 = arith.cmpi slt, %472, %473 : vector<1x256xi32>
    %475 = arith.andi %470, %474 : vector<1x256xi1>
    %cst_93 = arith.constant 0.000000e+00 : f32
    %476 = vector.shape_cast %475 : vector<1x256xi1> to vector<1x256xi1>
    %477 = vector.broadcast %476 : vector<1x256xi1> to vector<2x256xi1>
    %478 = vector.broadcast %cst_93 : f32 to vector<2x256xf32>
    %479 = arith.select %477, %466, %478 : vector<2x256xi1>, vector<2x256xf32>
    %480 = arith.addf %437, %479 : vector<2x256xf32>
    %c37 = arith.constant 37 : index
    %481 = memref.load %arg3[%c37] : memref<72xf32, #tpu.memory_space<smem>>
    %482 = vector.extract_strided_slice %185 {offsets = [0, 20], sizes = [2, 256], strides = [1, 1]} : vector<2x392xf32> to vector<2x256xf32>
    %483 = vector.broadcast %481 : f32 to vector<2x256xf32>
    %484 = arith.mulf %483, %482 : vector<2x256xf32>
    %c46 = arith.constant 46 : index
    %485 = memref.load %arg3[%c46] : memref<72xf32, #tpu.memory_space<smem>>
    %486 = vector.extract_strided_slice %186 {offsets = [0, 20], sizes = [2, 256], strides = [1, 1]} : vector<2x392xf32> to vector<2x256xf32>
    %487 = vector.broadcast %485 : f32 to vector<2x256xf32>
    %488 = arith.mulf %487, %486 : vector<2x256xf32>
    %489 = arith.addf %484, %488 : vector<2x256xf32>
    %c43 = arith.constant 43 : index
    %490 = memref.load %arg3[%c43] : memref<72xf32, #tpu.memory_space<smem>>
    %491 = vector.extract_strided_slice %185 {offsets = [0, 116], sizes = [2, 256], strides = [1, 1]} : vector<2x392xf32> to vector<2x256xf32>
    %492 = vector.broadcast %490 : f32 to vector<2x256xf32>
    %493 = arith.mulf %492, %491 : vector<2x256xf32>
    %c52 = arith.constant 52 : index
    %494 = memref.load %arg3[%c52] : memref<72xf32, #tpu.memory_space<smem>>
    %495 = vector.extract_strided_slice %186 {offsets = [0, 116], sizes = [2, 256], strides = [1, 1]} : vector<2x392xf32> to vector<2x256xf32>
    %496 = vector.broadcast %494 : f32 to vector<2x256xf32>
    %497 = arith.mulf %496, %495 : vector<2x256xf32>
    %498 = arith.addf %493, %497 : vector<2x256xf32>
    %499 = arith.addf %489, %498 : vector<2x256xf32>
    %500 = arith.addf %480, %499 : vector<2x256xf32>
    %c38 = arith.constant 38 : index
    %501 = memref.load %arg3[%c38] : memref<72xf32, #tpu.memory_space<smem>>
    %502 = vector.extract_strided_slice %185 {offsets = [0, 23], sizes = [2, 256], strides = [1, 1]} : vector<2x392xf32> to vector<2x256xf32>
    %503 = vector.broadcast %501 : f32 to vector<2x256xf32>
    %504 = arith.mulf %503, %502 : vector<2x256xf32>
    %c47 = arith.constant 47 : index
    %505 = memref.load %arg3[%c47] : memref<72xf32, #tpu.memory_space<smem>>
    %506 = vector.extract_strided_slice %186 {offsets = [0, 23], sizes = [2, 256], strides = [1, 1]} : vector<2x392xf32> to vector<2x256xf32>
    %507 = vector.broadcast %505 : f32 to vector<2x256xf32>
    %508 = arith.mulf %507, %506 : vector<2x256xf32>
    %509 = arith.addf %504, %508 : vector<2x256xf32>
    %c41 = arith.constant 41 : index
    %510 = memref.load %arg3[%c41] : memref<72xf32, #tpu.memory_space<smem>>
    %511 = vector.extract_strided_slice %185 {offsets = [0, 71], sizes = [2, 256], strides = [1, 1]} : vector<2x392xf32> to vector<2x256xf32>
    %512 = vector.broadcast %510 : f32 to vector<2x256xf32>
    %513 = arith.mulf %512, %511 : vector<2x256xf32>
    %c50 = arith.constant 50 : index
    %514 = memref.load %arg3[%c50] : memref<72xf32, #tpu.memory_space<smem>>
    %515 = vector.extract_strided_slice %186 {offsets = [0, 71], sizes = [2, 256], strides = [1, 1]} : vector<2x392xf32> to vector<2x256xf32>
    %516 = vector.broadcast %514 : f32 to vector<2x256xf32>
    %517 = arith.mulf %516, %515 : vector<2x256xf32>
    %518 = arith.addf %513, %517 : vector<2x256xf32>
    %519 = arith.addf %509, %518 : vector<2x256xf32>
    %c44 = arith.constant 44 : index
    %520 = memref.load %arg3[%c44] : memref<72xf32, #tpu.memory_space<smem>>
    %521 = vector.extract_strided_slice %185 {offsets = [0, 119], sizes = [2, 256], strides = [1, 1]} : vector<2x392xf32> to vector<2x256xf32>
    %522 = vector.broadcast %520 : f32 to vector<2x256xf32>
    %523 = arith.mulf %522, %521 : vector<2x256xf32>
    %c53 = arith.constant 53 : index
    %524 = memref.load %arg3[%c53] : memref<72xf32, #tpu.memory_space<smem>>
    %525 = vector.extract_strided_slice %186 {offsets = [0, 119], sizes = [2, 256], strides = [1, 1]} : vector<2x392xf32> to vector<2x256xf32>
    %526 = vector.broadcast %524 : f32 to vector<2x256xf32>
    %527 = arith.mulf %526, %525 : vector<2x256xf32>
    %528 = arith.addf %523, %527 : vector<2x256xf32>
    %529 = arith.addf %519, %528 : vector<2x256xf32>
    %c3_i32 = arith.constant 3 : i32
    %530 = vector.broadcast %c3_i32 : i32 to vector<1x256xi32>
    %531 = arith.addi %203, %530 : vector<1x256xi32>
    %c0_i32_94 = arith.constant 0 : i32
    %532 = vector.broadcast %c0_i32_94 : i32 to vector<1x256xi32>
    %533 = arith.cmpi sge, %531, %532 : vector<1x256xi32>
    %c3_i32_95 = arith.constant 3 : i32
    %534 = vector.broadcast %c3_i32_95 : i32 to vector<1x256xi32>
    %535 = arith.addi %203, %534 : vector<1x256xi32>
    %c16_i32_96 = arith.constant 16 : i32
    %536 = vector.broadcast %c16_i32_96 : i32 to vector<1x256xi32>
    %537 = arith.cmpi slt, %535, %536 : vector<1x256xi32>
    %538 = arith.andi %533, %537 : vector<1x256xi1>
    %cst_97 = arith.constant 0.000000e+00 : f32
    %539 = vector.shape_cast %538 : vector<1x256xi1> to vector<1x256xi1>
    %540 = vector.broadcast %539 : vector<1x256xi1> to vector<2x256xi1>
    %541 = vector.broadcast %cst_97 : f32 to vector<2x256xf32>
    %542 = arith.select %540, %529, %541 : vector<2x256xi1>, vector<2x256xf32>
    %543 = arith.addf %500, %542 : vector<2x256xf32>
    %c54 = arith.constant 54 : index
    %544 = memref.load %arg3[%c54] : memref<72xf32, #tpu.memory_space<smem>>
    %545 = vector.extract_strided_slice %185 {offsets = [0, 0], sizes = [2, 256], strides = [1, 1]} : vector<2x392xf32> to vector<2x256xf32>
    %546 = vector.broadcast %544 : f32 to vector<2x256xf32>
    %547 = arith.mulf %546, %545 : vector<2x256xf32>
    %c63 = arith.constant 63 : index
    %548 = memref.load %arg3[%c63] : memref<72xf32, #tpu.memory_space<smem>>
    %549 = vector.extract_strided_slice %186 {offsets = [0, 0], sizes = [2, 256], strides = [1, 1]} : vector<2x392xf32> to vector<2x256xf32>
    %550 = vector.broadcast %548 : f32 to vector<2x256xf32>
    %551 = arith.mulf %550, %549 : vector<2x256xf32>
    %552 = arith.addf %547, %551 : vector<2x256xf32>
    %c57 = arith.constant 57 : index
    %553 = memref.load %arg3[%c57] : memref<72xf32, #tpu.memory_space<smem>>
    %554 = vector.extract_strided_slice %185 {offsets = [0, 64], sizes = [2, 256], strides = [1, 1]} : vector<2x392xf32> to vector<2x256xf32>
    %555 = vector.broadcast %553 : f32 to vector<2x256xf32>
    %556 = arith.mulf %555, %554 : vector<2x256xf32>
    %c66 = arith.constant 66 : index
    %557 = memref.load %arg3[%c66] : memref<72xf32, #tpu.memory_space<smem>>
    %558 = vector.extract_strided_slice %186 {offsets = [0, 64], sizes = [2, 256], strides = [1, 1]} : vector<2x392xf32> to vector<2x256xf32>
    %559 = vector.broadcast %557 : f32 to vector<2x256xf32>
    %560 = arith.mulf %559, %558 : vector<2x256xf32>
    %561 = arith.addf %556, %560 : vector<2x256xf32>
    %562 = arith.addf %552, %561 : vector<2x256xf32>
    %c60 = arith.constant 60 : index
    %563 = memref.load %arg3[%c60] : memref<72xf32, #tpu.memory_space<smem>>
    %564 = vector.extract_strided_slice %185 {offsets = [0, 128], sizes = [2, 256], strides = [1, 1]} : vector<2x392xf32> to vector<2x256xf32>
    %565 = vector.broadcast %563 : f32 to vector<2x256xf32>
    %566 = arith.mulf %565, %564 : vector<2x256xf32>
    %c69 = arith.constant 69 : index
    %567 = memref.load %arg3[%c69] : memref<72xf32, #tpu.memory_space<smem>>
    %568 = vector.extract_strided_slice %186 {offsets = [0, 128], sizes = [2, 256], strides = [1, 1]} : vector<2x392xf32> to vector<2x256xf32>
    %569 = vector.broadcast %567 : f32 to vector<2x256xf32>
    %570 = arith.mulf %569, %568 : vector<2x256xf32>
    %571 = arith.addf %566, %570 : vector<2x256xf32>
    %572 = arith.addf %562, %571 : vector<2x256xf32>
    %c-4_i32 = arith.constant -4 : i32
    %573 = vector.broadcast %c-4_i32 : i32 to vector<1x256xi32>
    %574 = arith.addi %203, %573 : vector<1x256xi32>
    %c0_i32_98 = arith.constant 0 : i32
    %575 = vector.broadcast %c0_i32_98 : i32 to vector<1x256xi32>
    %576 = arith.cmpi sge, %574, %575 : vector<1x256xi32>
    %c-4_i32_99 = arith.constant -4 : i32
    %577 = vector.broadcast %c-4_i32_99 : i32 to vector<1x256xi32>
    %578 = arith.addi %203, %577 : vector<1x256xi32>
    %c16_i32_100 = arith.constant 16 : i32
    %579 = vector.broadcast %c16_i32_100 : i32 to vector<1x256xi32>
    %580 = arith.cmpi slt, %578, %579 : vector<1x256xi32>
    %581 = arith.andi %576, %580 : vector<1x256xi1>
    %cst_101 = arith.constant 0.000000e+00 : f32
    %582 = vector.shape_cast %581 : vector<1x256xi1> to vector<1x256xi1>
    %583 = vector.broadcast %582 : vector<1x256xi1> to vector<2x256xi1>
    %584 = vector.broadcast %cst_101 : f32 to vector<2x256xf32>
    %585 = arith.select %583, %572, %584 : vector<2x256xi1>, vector<2x256xf32>
    %586 = arith.addf %543, %585 : vector<2x256xf32>
    %c55 = arith.constant 55 : index
    %587 = memref.load %arg3[%c55] : memref<72xf32, #tpu.memory_space<smem>>
    %588 = vector.extract_strided_slice %185 {offsets = [0, 4], sizes = [2, 256], strides = [1, 1]} : vector<2x392xf32> to vector<2x256xf32>
    %589 = vector.broadcast %587 : f32 to vector<2x256xf32>
    %590 = arith.mulf %589, %588 : vector<2x256xf32>
    %c64 = arith.constant 64 : index
    %591 = memref.load %arg3[%c64] : memref<72xf32, #tpu.memory_space<smem>>
    %592 = vector.extract_strided_slice %186 {offsets = [0, 4], sizes = [2, 256], strides = [1, 1]} : vector<2x392xf32> to vector<2x256xf32>
    %593 = vector.broadcast %591 : f32 to vector<2x256xf32>
    %594 = arith.mulf %593, %592 : vector<2x256xf32>
    %595 = arith.addf %590, %594 : vector<2x256xf32>
    %c61 = arith.constant 61 : index
    %596 = memref.load %arg3[%c61] : memref<72xf32, #tpu.memory_space<smem>>
    %597 = vector.extract_strided_slice %185 {offsets = [0, 132], sizes = [2, 256], strides = [1, 1]} : vector<2x392xf32> to vector<2x256xf32>
    %598 = vector.broadcast %596 : f32 to vector<2x256xf32>
    %599 = arith.mulf %598, %597 : vector<2x256xf32>
    %c70 = arith.constant 70 : index
    %600 = memref.load %arg3[%c70] : memref<72xf32, #tpu.memory_space<smem>>
    %601 = vector.extract_strided_slice %186 {offsets = [0, 132], sizes = [2, 256], strides = [1, 1]} : vector<2x392xf32> to vector<2x256xf32>
    %602 = vector.broadcast %600 : f32 to vector<2x256xf32>
    %603 = arith.mulf %602, %601 : vector<2x256xf32>
    %604 = arith.addf %599, %603 : vector<2x256xf32>
    %605 = arith.addf %595, %604 : vector<2x256xf32>
    %606 = arith.addf %586, %605 : vector<2x256xf32>
    %c56 = arith.constant 56 : index
    %607 = memref.load %arg3[%c56] : memref<72xf32, #tpu.memory_space<smem>>
    %608 = vector.extract_strided_slice %185 {offsets = [0, 8], sizes = [2, 256], strides = [1, 1]} : vector<2x392xf32> to vector<2x256xf32>
    %609 = vector.broadcast %607 : f32 to vector<2x256xf32>
    %610 = arith.mulf %609, %608 : vector<2x256xf32>
    %c65 = arith.constant 65 : index
    %611 = memref.load %arg3[%c65] : memref<72xf32, #tpu.memory_space<smem>>
    %612 = vector.extract_strided_slice %186 {offsets = [0, 8], sizes = [2, 256], strides = [1, 1]} : vector<2x392xf32> to vector<2x256xf32>
    %613 = vector.broadcast %611 : f32 to vector<2x256xf32>
    %614 = arith.mulf %613, %612 : vector<2x256xf32>
    %615 = arith.addf %610, %614 : vector<2x256xf32>
    %c59 = arith.constant 59 : index
    %616 = memref.load %arg3[%c59] : memref<72xf32, #tpu.memory_space<smem>>
    %617 = vector.extract_strided_slice %185 {offsets = [0, 72], sizes = [2, 256], strides = [1, 1]} : vector<2x392xf32> to vector<2x256xf32>
    %618 = vector.broadcast %616 : f32 to vector<2x256xf32>
    %619 = arith.mulf %618, %617 : vector<2x256xf32>
    %c68 = arith.constant 68 : index
    %620 = memref.load %arg3[%c68] : memref<72xf32, #tpu.memory_space<smem>>
    %621 = vector.extract_strided_slice %186 {offsets = [0, 72], sizes = [2, 256], strides = [1, 1]} : vector<2x392xf32> to vector<2x256xf32>
    %622 = vector.broadcast %620 : f32 to vector<2x256xf32>
    %623 = arith.mulf %622, %621 : vector<2x256xf32>
    %624 = arith.addf %619, %623 : vector<2x256xf32>
    %625 = arith.addf %615, %624 : vector<2x256xf32>
    %c62 = arith.constant 62 : index
    %626 = memref.load %arg3[%c62] : memref<72xf32, #tpu.memory_space<smem>>
    %627 = vector.extract_strided_slice %185 {offsets = [0, 136], sizes = [2, 256], strides = [1, 1]} : vector<2x392xf32> to vector<2x256xf32>
    %628 = vector.broadcast %626 : f32 to vector<2x256xf32>
    %629 = arith.mulf %628, %627 : vector<2x256xf32>
    %c71 = arith.constant 71 : index
    %630 = memref.load %arg3[%c71] : memref<72xf32, #tpu.memory_space<smem>>
    %631 = vector.extract_strided_slice %186 {offsets = [0, 136], sizes = [2, 256], strides = [1, 1]} : vector<2x392xf32> to vector<2x256xf32>
    %632 = vector.broadcast %630 : f32 to vector<2x256xf32>
    %633 = arith.mulf %632, %631 : vector<2x256xf32>
    %634 = arith.addf %629, %633 : vector<2x256xf32>
    %635 = arith.addf %625, %634 : vector<2x256xf32>
    %c4_i32 = arith.constant 4 : i32
    %636 = vector.broadcast %c4_i32 : i32 to vector<1x256xi32>
    %637 = arith.addi %203, %636 : vector<1x256xi32>
    %c0_i32_102 = arith.constant 0 : i32
    %638 = vector.broadcast %c0_i32_102 : i32 to vector<1x256xi32>
    %639 = arith.cmpi sge, %637, %638 : vector<1x256xi32>
    %c4_i32_103 = arith.constant 4 : i32
    %640 = vector.broadcast %c4_i32_103 : i32 to vector<1x256xi32>
    %641 = arith.addi %203, %640 : vector<1x256xi32>
    %c16_i32_104 = arith.constant 16 : i32
    %642 = vector.broadcast %c16_i32_104 : i32 to vector<1x256xi32>
    %643 = arith.cmpi slt, %641, %642 : vector<1x256xi32>
    %644 = arith.andi %639, %643 : vector<1x256xi1>
    %cst_105 = arith.constant 0.000000e+00 : f32
    %645 = vector.shape_cast %644 : vector<1x256xi1> to vector<1x256xi1>
    %646 = vector.broadcast %645 : vector<1x256xi1> to vector<2x256xi1>
    %647 = vector.broadcast %cst_105 : f32 to vector<2x256xf32>
    %648 = arith.select %646, %635, %647 : vector<2x256xi1>, vector<2x256xf32>
    %649 = arith.addf %606, %648 : vector<2x256xf32>
    %650 = arith.negf %649 : vector<2x256xf32>
    %651 = math.exp %650 : vector<2x256xf32>
    %cst_106 = arith.constant 1.000000e+00 : f32
    %652 = vector.broadcast %cst_106 : f32 to vector<2x256xf32>
    %653 = arith.addf %652, %651 : vector<2x256xf32>
    %654 = arith.divf %652, %653 : vector<2x256xf32>
    %655 = vector.shape_cast %71 : vector<2x16xf32> to vector<2x16x1xf32>
    %656 = vector.broadcast %655 : vector<2x16x1xf32> to vector<2x16x256xf32>
    %657 = arith.mulf %0, %656 : vector<2x16x256xf32>
    %658 = vector.shape_cast %654 : vector<2x256xf32> to vector<2x1x256xf32>
    %659 = vector.broadcast %658 : vector<2x1x256xf32> to vector<2x16x256xf32>
    %660 = arith.mulf %657, %659 : vector<2x16x256xf32>
    %c0_107 = arith.constant 0 : index
    %c0_108 = arith.constant 0 : index
    %c0_109 = arith.constant 0 : index
    %661 = vector.load %arg5[%c0_107, %c0_108, %c0_109] : memref<2x16x256xf32, #tpu.memory_space<vmem>>, vector<2x16x256xf32>
    tpu.vector_store %arg5[%c0_107, %c0_108, %c0_109], %660 {strides = array<i32>} : memref<2x16x256xf32, #tpu.memory_space<vmem>>, vector<2x16x256xf32>,
    return
  }
  func.func @transform_0(%arg0: i32) -> (i32, i32, i32) {
    %c0_i32 = arith.constant 0 : i32
    %c0_i32_0 = arith.constant 0 : i32
    %c0_i32_1 = arith.constant 0 : i32
    return %arg0, %c0_i32, %c0_i32_0 : i32, i32, i32
  }
  func.func @transform_1(%arg0: i32) -> i32 {
    %c0_i32 = arith.constant 0 : i32
    %c0_i32_0 = arith.constant 0 : i32
    return %c0_i32 : i32
  }
  func.func @transform_2(%arg0: i32) -> i32 {
    %c0_i32 = arith.constant 0 : i32
    %c0_i32_0 = arith.constant 0 : i32
    return %c0_i32 : i32
  }
  func.func @transform_3(%arg0: i32) -> i32 {
    %c0_i32 = arith.constant 0 : i32
    %c0_i32_0 = arith.constant 0 : i32
    return %c0_i32 : i32
  }
  func.func @transform_4(%arg0: i32) -> (i32, i32, i32) {
    %c0_i32 = arith.constant 0 : i32
    %c0_i32_0 = arith.constant 0 : i32
    %c0_i32_1 = arith.constant 0 : i32
    return %arg0, %c0_i32, %c0_i32_0 : i32, i32, i32
  }
}

</mosaic_0001>

<llo_original>
// kernel: tpu_custom_call.1
$region0: #{tpu_custom_call.1}
  #allocation0 [shape = 'u32[]', space=smem, size = 0x4, offset = 0x4, fixed_abs, tag = 'smem constant byte address 0x4 - core index']
  #allocation1 [shape = 'u32[72,128]{1,0:T(1,128)}', space=vmem, size = 0x9000, scoped, tag = 'internal scratch']
  #allocation2 [shape = 'f32[1]{0:T(128)S(6)}', space=smem, size = 0x200, scoped, tag = 'scoped memory for tpu_custom_call.1']
  %s0 = inlined_call_operand.hbm [shape: f32[2,16,256], index: 0, kind: input, shape index: {}]
  %s1 = inlined_call_operand.vmem [shape: f32[12], index: 1, kind: input, shape index: {}]
  %s2 = inlined_call_operand.vmem [shape: f32[72], index: 2, kind: input, shape index: {}]
  %s3 = inlined_call_operand.<no memory space> [shape: f32[1], index: 3, kind: input, shape index: {}]
  %s4 = inlined_call_operand.hbm [shape: f32[2,16,256], index: 4, kind: output, shape index: {}]
  %s5 = sld [smem:[#allocation0]]
  $region38: #{tpu_custom_call.1} parent=0
    _
  %s7 = ssub.s32 1, %s5
  %s8 = scalar_select 0, %s7, %s5
  %9 = sst [smem:[#allocation2]] %s3
  $region1: #{tpu_custom_call.1} parent=0
    #allocation3 [shape = 'u8[32768]{0}', space=vmem, size = 0x8000, scoped, tag = 'input window, operand 0, single buffered']
    #allocation4 [shape = 's32[1]{0}', space=sflag, size = 0x4, scoped, tag = 'scoped memory for tpu_custom_call.1']
    #allocation5 [shape = 's32[1]{0}', space=sflag, size = 0x4, scoped, tag = 'scoped memory for tpu_custom_call.1']
    #allocation6 [shape = 's32[1]{0}', space=sflag, size = 0x4, scoped, tag = 'scoped memory for tpu_custom_call.1']
    #allocation7 [shape = 'u8[512]{0}', space=smem, size = 0x200, scoped, tag = 'input window, operand 1, single buffered']
    #allocation8 [shape = 'u8[512]{0}', space=smem, size = 0x200, scoped, tag = 'input window, operand 2, single buffered']
    #allocation9 [shape = 's32[1]{0}', space=sflag, size = 0x4, scoped, tag = 'scoped memory for tpu_custom_call.1']
    #allocation10 [shape = 'u8[32768]{0}', space=vmem, size = 0x8000, scoped, tag = 'output window, operand 0, single buffered']
    %10 = vsyncpa [#allocation4], 0
    %11 = vsyncpa [#allocation6], 0
    %12 = vsyncpa [#allocation9], 0
    %13 = vsyncpa [#allocation5], 0
    // Predicated region
    $region2: #{tpu_custom_call.1} parent=1 // pred_check
      _
    $region3: #{tpu_custom_call.1} parent=1 // pred_check_branch
      %15 = sbr.rel (0) target = $region5
    $region4: #{tpu_custom_call.1} parent=1 // pred_region
      %17 = vsyncadd [#allocation4], 0
      %s18 = sshll.u32 %s0, 4
      %s19 = int_to_ptr.hbm [resolvable:$true] %s18
      %s20 = sshll.u32 [#allocation3], 4
      %s21 = int_to_ptr.vmem [resolvable:$true] %s20
      %26 = dma.hbm_to_vmem [thread:$0]  %s19, 1024, %s21, [#allocation4], 256, 256, 16
    $region5: #{tpu_custom_call.1} parent=1 // pred_fallthru
      _
    // Predicated region
    $region6: #{tpu_custom_call.1} parent=1 // pred_check
      _
    $region7: #{tpu_custom_call.1} parent=1 // pred_check_branch
      %28 = sbr.rel (0) target = $region9
    $region8: #{tpu_custom_call.1} parent=1 // pred_region
      %30 = vsyncadd [#allocation6], 0
      %s32 = sshll.u32 %s1, 4
      %s33 = int_to_ptr.vmem [resolvable:$true] %s32
      %35 = dma.vmem_to_smem %s33, 16, [#allocation7], [#allocation6]
    $region9: #{tpu_custom_call.1} parent=1 // pred_fallthru
      _
    // Predicated region
    $region10: #{tpu_custom_call.1} parent=1 // pred_check
      _
    $region11: #{tpu_custom_call.1} parent=1 // pred_check_branch
      %37 = sbr.rel (0) target = $region13
    $region12: #{tpu_custom_call.1} parent=1 // pred_region
      %39 = vsyncadd [#allocation9], 0
      %s41 = sshll.u32 %s2, 4
      %s42 = int_to_ptr.vmem [resolvable:$true] %s41
      %44 = dma.vmem_to_smem %s42, 16, [#allocation8], [#allocation9]
    $region13: #{tpu_custom_call.1} parent=1 // pred_fallthru
      _
    // Predicated region
    $region14: #{tpu_custom_call.1} parent=1 // pred_check
      _
    $region15: #{tpu_custom_call.1} parent=1 // pred_check_branch
      %46 = sbr.rel (0) target = $region17
    $region16: #{tpu_custom_call.1} parent=1 // pred_region
      _
    $region17: #{tpu_custom_call.1} parent=1 // pred_fallthru
      _
    // Predicated region
    $region18: #{tpu_custom_call.1} parent=1 // pred_check
      _
    $region19: #{tpu_custom_call.1} parent=1 // pred_check_branch
      %48 = sbr.rel (0) target = $region21
    $region20: #{tpu_custom_call.1} parent=1 // pred_region
      %50 = dma.done [#allocation4], 1024
    $region21: #{tpu_custom_call.1} parent=1 // pred_fallthru
      _
    // Predicated region
    $region22: #{tpu_custom_call.1} parent=1 // pred_check
      _
    $region23: #{tpu_custom_call.1} parent=1 // pred_check_branch
      %52 = sbr.rel (0) target = $region25
    $region24: #{tpu_custom_call.1} parent=1 // pred_region
      %54 = dma.done [#allocation6], 16
    $region25: #{tpu_custom_call.1} parent=1 // pred_fallthru
      _
    // Predicated region
    $region26: #{tpu_custom_call.1} parent=1 // pred_check
      _
    $region27: #{tpu_custom_call.1} parent=1 // pred_check_branch
      %56 = sbr.rel (0) target = $region29
    $region28: #{tpu_custom_call.1} parent=1 // pred_region
      %58 = dma.done [#allocation9], 16
    $region29: #{tpu_custom_call.1} parent=1 // pred_fallthru
      _
    %59 = sfence
    %v60 = vld [vmem:[#allocation3] sm:$0xff]
    %v61 = vld [vmem:[#allocation3 + $0x8] sm:$0xff]
    %v62 = vld [vmem:[#allocation3 + $0x10] sm:$0xff]
    %v63 = vld [vmem:[#allocation3 + $0x18] sm:$0xff]
    %v64 = vld [vmem:[#allocation3 + $0x20] sm:$0xff]
    %v65 = vld [vmem:[#allocation3 + $0x28] sm:$0xff]
    %v66 = vld [vmem:[#allocation3 + $0x30] sm:$0xff]
    %v67 = vld [vmem:[#allocation3 + $0x38] sm:$0xff]
    %v68 = vadd.f32 %v60, %v61
    %69 = vadd.xlane.f32.xlu0 %v68
    %v70 = vpop.xlane.xlu0 %69
    %v71 = vadd.f32 %v62, %v63
    %72 = vadd.xlane.f32.xlu0 %v71
    %v73 = vpop.xlane.xlu0 %72
    %v74 = vadd.f32 %v64, %v65
    %75 = vadd.xlane.f32.xlu0 %v74
    %v76 = vpop.xlane.xlu0 %75
    %v77 = vadd.f32 %v66, %v67
    %78 = vadd.xlane.f32.xlu0 %v77
    %v79 = vpop.xlane.xlu0 %78
    %v80 = vrcp.pop 256.0
    %v81 = vmul.f32 256.0, %v80
    %v82 = vsub.f32 1.0, %v81
    %v83 = vmul.f32 %v80, %v82
    %v84 = vadd.f32 %v80, %v83
    %vm85 = vweird.f32 %v80
    %v86 = vsel %vm85, %v80, %v84
    %v87 = vmul.f32 %v70, %v86
    %v88 = vmul.f32 %v73, %v86
    %v89 = vmul.f32 %v76, %v86
    %v90 = vmul.f32 %v79, %v86
    %v95 = vlaneseq
    %v96 = vand.u32 %v95, 127
    %v97 = vadd.s32 %v96, 4294967292
    %v98 = vperm.slane %v87, %v97
    %v99 = vadd.s32 %v96, 4294967284
    %v100 = vperm.slane %v88, %v99
    %vm101 = vcmask 162912
    %v102 = vsel %vm101, %v100, %v98
    %v103 = vperm.slane %v89, %v97
    %v104 = vperm.slane %v90, %v99
    %v105 = vsel %vm101, %v104, %v103
    %vm106 = vcmask 1041409
    %v107 = vsel %vm106, %v105, %v102
    %vm109 = vcmask 31744
    %v110 = vsel %vm109, 0.0, %v107
    %vm111 = vcmask 162816
    %v112 = vsel %vm111, %v110, 0.0
    %s113 = sld [smem:[#allocation7]]
    %v114 = vstv %s113
    %v115 = vmul.f32 %v114, %v112
    %v116 = vadd.f32 %v115, 0.0
    %s117 = sld [smem:[#allocation7 + $0x1]]
    %v118 = vstv %s117
    %v119 = vmul.f32 %v118, %v112
    %121 = vrot.lane.b32.xlu0 %v119, 127
    %v122 = vpop.permute.xlu0 %121
    %v124 = vadd.f32 %v116, %v122
    %s125 = sld [smem:[#allocation7 + $0x2]]
    %v126 = vstv %s125
    %v127 = vmul.f32 %v126, %v112
    %129 = vrot.lane.b32.xlu0 %v127, 126
    %v130 = vpop.permute.xlu0 %129
    %v132 = vadd.f32 %v124, %v130
    %s133 = sld [smem:[#allocation7 + $0x3]]
    %v134 = vstv %s133
    %v135 = vmul.f32 %v134, %v112
    %137 = vrot.lane.b32.xlu0 %v135, 1
    %v138 = vpop.permute.xlu0 %137
    %v140 = vadd.f32 %v132, %v138
    %s141 = sld [smem:[#allocation7 + $0x4]]
    %v142 = vstv %s141
    %v143 = vmul.f32 %v142, %v112
    %145 = vrot.lane.b32.xlu0 %v143, 127
    %v146 = vpop.permute.xlu0 %145
    %v148 = vadd.f32 %v140, %v146
    %s149 = sld [smem:[#allocation7 + $0x5]]
    %v150 = vstv %s149
    %v151 = vmul.f32 %v150, %v112
    %153 = vrot.lane.b32.xlu0 %v151, 125
    %v154 = vpop.permute.xlu0 %153
    %v156 = vadd.f32 %v148, %v154
    %s157 = sld [smem:[#allocation7 + $0x6]]
    %v158 = vstv %s157
    %v159 = vmul.f32 %v158, %v112
    %161 = vrot.lane.b32.xlu0 %v159, 2
    %v162 = vpop.permute.xlu0 %161
    %v164 = vadd.f32 %v156, %v162
    %s165 = sld [smem:[#allocation7 + $0x7]]
    %v166 = vstv %s165
    %v167 = vmul.f32 %v166, %v112
    %169 = vrot.lane.b32.xlu0 %v167, 127
    %v170 = vpop.permute.xlu0 %169
    %v172 = vadd.f32 %v164, %v170
    %s173 = sld [smem:[#allocation7 + $0x8]]
    %v174 = vstv %s173
    %v175 = vmul.f32 %v174, %v112
    %177 = vrot.lane.b32.xlu0 %v175, 124
    %v178 = vpop.permute.xlu0 %177
    %v180 = vadd.f32 %v172, %v178
    %s181 = sld [smem:[#allocation7 + $0x9]]
    %v182 = vstv %s181
    %v183 = vmul.f32 %v182, %v112
    %185 = vrot.lane.b32.xlu0 %v183, 3
    %v186 = vpop.permute.xlu0 %185
    %v188 = vadd.f32 %v180, %v186
    %s189 = sld [smem:[#allocation7 + $0xa]]
    %v190 = vstv %s189
    %v191 = vmul.f32 %v190, %v112
    %193 = vrot.lane.b32.xlu0 %v191, 127
    %v194 = vpop.permute.xlu0 %193
    %v196 = vadd.f32 %v188, %v194
    %s197 = sld [smem:[#allocation7 + $0xb]]
    %v198 = vstv %s197
    %v199 = vmul.f32 %v198, %v112
    %201 = vrot.lane.b32.xlu0 %v199, 123
    %v202 = vpop.permute.xlu0 %201
    %v204 = vadd.f32 %v196, %v202
    %v205 = vxor.u32 %v204, 2147483648
    %v206 = vmul.f32 %v205, 1.442695
    %v207 = vpow.pop %v206
    %v208 = vadd.f32 %v207, 1.0
    %v209 = vrcp.pop %v208
    %v210 = vmul.f32 %v208, %v209
    %v211 = vsub.f32 1.0, %v210
    %v212 = vmul.f32 %v209, %v211
    %v213 = vadd.f32 %v209, %v212
    %vm214 = vweird.f32 %v208
    %vm215 = vweird.f32 %v209
    %vm216 = vmor %vm214, %vm215
    %v217 = vsel %vm216, %v209, %v213
    %v218 = vand.u32 2147483647, %v208
    %vm219 = vcmp.eq.f32.partialorder %v218, 8.507059e+37
    %v220 = vand.u32 %v208, 2147483648
    %v221 = vor.u32 1.1754944e-38, %v220
    %v222 = vsel %vm219, %v221, %v217
    %v223 = vmul.f32 1.0, %v222
    %v224 = vld [vmem:[#allocation3] ss:$8 sm:$0x3]
    %s225 = scalar_lea.vmem [#allocation3], 32
    %v226 = vld [vmem:[%s225] ss:$8 sm:$0x3]
    %228 = vset.pattern.permute.xlu0 3
    %229 = vperm.xlu0 %228, %v223
    %v230 = vpop.permute.xlu0 %229
    %234 = vst [vmem:[#allocation1] ss:$9 sm:$0xff] %v224
    %s235 = scalar_lea.vmem [#allocation1], 1
    %236 = vst [vmem:[%s235] ss:$9 sm:$0xff] %v226
    %v237 = vld [vmem:[#allocation1] sm:$0xff]
    %v238 = vld [vmem:[#allocation1 + $0x9] sm:$0xff]
    %v241 = vmul.f32 %v230, %v237
    %v242 = vmul.f32 %v230, %v238
    %s243 = scalar_lea.vmem [#allocation3], 1
    %v244 = vld [vmem:[%s243] ss:$8 sm:$0x3]
    %s245 = scalar_lea.vmem [#allocation3], 33
    %v246 = vld [vmem:[%s245] ss:$8 sm:$0x3]
    %247 = vset.pattern.permute.xlu0 4
    %248 = vperm.xlu0 %247, %v223
    %v249 = vpop.permute.xlu0 %248
    %253 = vst [vmem:[#allocation1] ss:$9 sm:$0xff] %v244
    %s254 = scalar_lea.vmem [#allocation1], 1
    %255 = vst [vmem:[%s254] ss:$9 sm:$0xff] %v246
    %v256 = vld [vmem:[#allocation1] sm:$0xff]
    %v257 = vld [vmem:[#allocation1 + $0x9] sm:$0xff]
    %v260 = vmul.f32 %v249, %v256
    %v261 = vmul.f32 %v249, %v257
    %v262 = vmax.f32 %v241, %v260
    %v263 = vmax.f32 %v242, %v261
    %v264 = vadd.f32 %v241, %v260
    %v265 = vadd.f32 %v242, %v261
    %s266 = scalar_lea.vmem [#allocation3], 2
    %v267 = vld [vmem:[%s266] ss:$8 sm:$0x3]
    %s268 = scalar_lea.vmem [#allocation3], 34
    %v269 = vld [vmem:[%s268] ss:$8 sm:$0x3]
    %270 = vset.pattern.permute.xlu0 5
    %271 = vperm.xlu0 %270, %v223
    %v272 = vpop.permute.xlu0 %271
    %276 = vst [vmem:[#allocation1] ss:$9 sm:$0xff] %v267
    %s277 = scalar_lea.vmem [#allocation1], 1
    %278 = vst [vmem:[%s277] ss:$9 sm:$0xff] %v269
    %v279 = vld [vmem:[#allocation1] sm:$0xff]
    %v280 = vld [vmem:[#allocation1 + $0x9] sm:$0xff]
    %v283 = vmul.f32 %v272, %v279
    %v284 = vmul.f32 %v272, %v280
    %v285 = vmax.f32 %v262, %v283
    %v286 = vmax.f32 %v263, %v284
    %v287 = vadd.f32 %v264, %v283
    %v288 = vadd.f32 %v265, %v284
    %s289 = scalar_lea.vmem [#allocation3], 3
    %v290 = vld [vmem:[%s289] ss:$8 sm:$0x3]
    %s291 = scalar_lea.vmem [#allocation3], 35
    %v292 = vld [vmem:[%s291] ss:$8 sm:$0x3]
    %293 = vset.pattern.permute.xlu0 6
    %294 = vperm.xlu0 %293, %v223
    %v295 = vpop.permute.xlu0 %294
    %299 = vst [vmem:[#allocation1] ss:$9 sm:$0xff] %v290
    %s300 = scalar_lea.vmem [#allocation1], 1
    %301 = vst [vmem:[%s300] ss:$9 sm:$0xff] %v292
    %v302 = vld [vmem:[#allocation1] sm:$0xff]
    %v303 = vld [vmem:[#allocation1 + $0x9] sm:$0xff]
    %v306 = vmul.f32 %v295, %v302
    %v307 = vmul.f32 %v295, %v303
    %v308 = vmax.f32 %v285, %v306
    %v309 = vmax.f32 %v286, %v307
    %v310 = vadd.f32 %v287, %v306
    %v311 = vadd.f32 %v288, %v307
    %s312 = scalar_lea.vmem [#allocation3], 4
    %v313 = vld [vmem:[%s312] ss:$8 sm:$0x3]
    %s314 = scalar_lea.vmem [#allocation3], 36
    %v315 = vld [vmem:[%s314] ss:$8 sm:$0x3]
    %316 = vset.pattern.permute.xlu0 7
    %317 = vperm.xlu0 %316, %v223
    %v318 = vpop.permute.xlu0 %317
    %322 = vst [vmem:[#allocation1] ss:$9 sm:$0xff] %v313
    %s323 = scalar_lea.vmem [#allocation1], 1
    %324 = vst [vmem:[%s323] ss:$9 sm:$0xff] %v315
    %v325 = vld [vmem:[#allocation1] sm:$0xff]
    %v326 = vld [vmem:[#allocation1 + $0x9] sm:$0xff]
    %v329 = vmul.f32 %v318, %v325
    %v330 = vmul.f32 %v318, %v326
    %v331 = vmax.f32 %v308, %v329
    %v332 = vmax.f32 %v309, %v330
    %v333 = vadd.f32 %v310, %v329
    %v334 = vadd.f32 %v311, %v330
    %s335 = scalar_lea.vmem [#allocation3], 5
    %v336 = vld [vmem:[%s335] ss:$8 sm:$0x3]
    %s337 = scalar_lea.vmem [#allocation3], 37
    %v338 = vld [vmem:[%s337] ss:$8 sm:$0x3]
    %339 = vset.pattern.permute.xlu0 8
    %340 = vperm.xlu0 %339, %v223
    %v341 = vpop.permute.xlu0 %340
    %345 = vst [vmem:[#allocation1] ss:$9 sm:$0xff] %v336
    %s346 = scalar_lea.vmem [#allocation1], 1
    %347 = vst [vmem:[%s346] ss:$9 sm:$0xff] %v338
    %v348 = vld [vmem:[#allocation1] sm:$0xff]
    %v349 = vld [vmem:[#allocation1 + $0x9] sm:$0xff]
    %v352 = vmul.f32 %v341, %v348
    %v353 = vmul.f32 %v341, %v349
    %v354 = vmax.f32 %v331, %v352
    %v355 = vmax.f32 %v332, %v353
    %v356 = vadd.f32 %v333, %v352
    %v357 = vadd.f32 %v334, %v353
    %s358 = scalar_lea.vmem [#allocation3], 6
    %v359 = vld [vmem:[%s358] ss:$8 sm:$0x3]
    %s360 = scalar_lea.vmem [#allocation3], 38
    %v361 = vld [vmem:[%s360] ss:$8 sm:$0x3]
    %362 = vset.pattern.permute.xlu0 9
    %363 = vperm.xlu0 %362, %v223
    %v364 = vpop.permute.xlu0 %363
    %368 = vst [vmem:[#allocation1] ss:$9 sm:$0xff] %v359
    %s369 = scalar_lea.vmem [#allocation1], 1
    %370 = vst [vmem:[%s369] ss:$9 sm:$0xff] %v361
    %v371 = vld [vmem:[#allocation1] sm:$0xff]
    %v372 = vld [vmem:[#allocation1 + $0x9] sm:$0xff]
    %v375 = vmul.f32 %v364, %v371
    %v376 = vmul.f32 %v364, %v372
    %v377 = vmax.f32 %v354, %v375
    %v378 = vmax.f32 %v355, %v376
    %v379 = vadd.f32 %v356, %v375
    %v380 = vadd.f32 %v357, %v376
    %s381 = scalar_lea.vmem [#allocation3], 7
    %v382 = vld [vmem:[%s381] ss:$8 sm:$0x3]
    %s383 = scalar_lea.vmem [#allocation3], 39
    %v384 = vld [vmem:[%s383] ss:$8 sm:$0x3]
    %385 = vset.pattern.permute.xlu0 10
    %386 = vperm.xlu0 %385, %v223
    %v387 = vpop.permute.xlu0 %386
    %391 = vst [vmem:[#allocation1] ss:$9 sm:$0xff] %v382
    %s392 = scalar_lea.vmem [#allocation1], 1
    %393 = vst [vmem:[%s392] ss:$9 sm:$0xff] %v384
    %v394 = vld [vmem:[#allocation1] sm:$0xff]
    %v395 = vld [vmem:[#allocation1 + $0x9] sm:$0xff]
    %v398 = vmul.f32 %v387, %v394
    %v399 = vmul.f32 %v387, %v395
    %v400 = vmax.f32 %v377, %v398
    %v401 = vmax.f32 %v378, %v399
    %v402 = vadd.f32 %v379, %v398
    %v403 = vadd.f32 %v380, %v399
    %s404 = scalar_lea.vmem [#allocation3], 16
    %v405 = vld [vmem:[%s404] ss:$8 sm:$0x3]
    %s406 = scalar_lea.vmem [#allocation3], 48
    %v407 = vld [vmem:[%s406] ss:$8 sm:$0x3]
    %408 = vset.pattern.permute.xlu0 11
    %409 = vperm.xlu0 %408, %v223
    %v410 = vpop.permute.xlu0 %409
    %414 = vst [vmem:[#allocation1] ss:$9 sm:$0xff] %v405
    %s415 = scalar_lea.vmem [#allocation1], 1
    %416 = vst [vmem:[%s415] ss:$9 sm:$0xff] %v407
    %v417 = vld [vmem:[#allocation1] sm:$0xff]
    %v418 = vld [vmem:[#allocation1 + $0x9] sm:$0xff]
    %v421 = vmul.f32 %v410, %v417
    %v422 = vmul.f32 %v410, %v418
    %v423 = vmax.f32 %v400, %v421
    %v424 = vmax.f32 %v401, %v422
    %v425 = vadd.f32 %v402, %v421
    %v426 = vadd.f32 %v403, %v422
    %s427 = scalar_lea.vmem [#allocation3], 17
    %v428 = vld [vmem:[%s427] ss:$8 sm:$0x3]
    %s429 = scalar_lea.vmem [#allocation3], 49
    %v430 = vld [vmem:[%s429] ss:$8 sm:$0x3]
    %431 = vset.pattern.permute.xlu0 12
    %432 = vperm.xlu0 %431, %v223
    %v433 = vpop.permute.xlu0 %432
    %437 = vst [vmem:[#allocation1] ss:$9 sm:$0xff] %v428
    %s438 = scalar_lea.vmem [#allocation1], 1
    %439 = vst [vmem:[%s438] ss:$9 sm:$0xff] %v430
    %v440 = vld [vmem:[#allocation1] sm:$0xff]
    %v441 = vld [vmem:[#allocation1 + $0x9] sm:$0xff]
    %v444 = vmul.f32 %v433, %v440
    %v445 = vmul.f32 %v433, %v441
    %v446 = vmax.f32 %v423, %v444
    %v447 = vmax.f32 %v424, %v445
    %v448 = vadd.f32 %v425, %v444
    %v449 = vadd.f32 %v426, %v445
    %s450 = scalar_lea.vmem [#allocation3], 18
    %v451 = vld [vmem:[%s450] ss:$8 sm:$0x3]
    %s452 = scalar_lea.vmem [#allocation3], 50
    %v453 = vld [vmem:[%s452] ss:$8 sm:$0x3]
    %454 = vset.pattern.permute.xlu0 13
    %455 = vperm.xlu0 %454, %v223
    %v456 = vpop.permute.xlu0 %455
    %460 = vst [vmem:[#allocation1] ss:$9 sm:$0xff] %v451
    %s461 = scalar_lea.vmem [#allocation1], 1
    %462 = vst [vmem:[%s461] ss:$9 sm:$0xff] %v453
    %v463 = vld [vmem:[#allocation1] sm:$0xff]
    %v464 = vld [vmem:[#allocation1 + $0x9] sm:$0xff]
    %v467 = vmul.f32 %v456, %v463
    %v468 = vmul.f32 %v456, %v464
    %v469 = vmax.f32 %v446, %v467
    %v470 = vmax.f32 %v447, %v468
    %v471 = vadd.f32 %v448, %v467
    %v472 = vadd.f32 %v449, %v468
    %s473 = scalar_lea.vmem [#allocation3], 19
    %v474 = vld [vmem:[%s473] ss:$8 sm:$0x3]
    %s475 = scalar_lea.vmem [#allocation3], 51
    %v476 = vld [vmem:[%s475] ss:$8 sm:$0x3]
    %477 = vset.pattern.permute.xlu0 14
    %478 = vperm.xlu0 %477, %v223
    %v479 = vpop.permute.xlu0 %478
    %483 = vst [vmem:[#allocation1] ss:$9 sm:$0xff] %v474
    %s484 = scalar_lea.vmem [#allocation1], 1
    %485 = vst [vmem:[%s484] ss:$9 sm:$0xff] %v476
    %v486 = vld [vmem:[#allocation1] sm:$0xff]
    %v487 = vld [vmem:[#allocation1 + $0x9] sm:$0xff]
    %v490 = vmul.f32 %v479, %v486
    %v491 = vmul.f32 %v479, %v487
    %v492 = vmax.f32 %v469, %v490
    %v493 = vmax.f32 %v470, %v491
    %v494 = vadd.f32 %v471, %v490
    %v495 = vadd.f32 %v472, %v491
    %s496 = scalar_lea.vmem [#allocation3], 20
    %v497 = vld [vmem:[%s496] ss:$8 sm:$0x3]
    %s498 = scalar_lea.vmem [#allocation3], 52
    %v499 = vld [vmem:[%s498] ss:$8 sm:$0x3]
    %500 = vset.pattern.permute.xlu0 15
    %501 = vperm.xlu0 %500, %v223
    %v502 = vpop.permute.xlu0 %501
    %506 = vst [vmem:[#allocation1] ss:$9 sm:$0xff] %v497
    %s507 = scalar_lea.vmem [#allocation1], 1
    %508 = vst [vmem:[%s507] ss:$9 sm:$0xff] %v499
    %v509 = vld [vmem:[#allocation1] sm:$0xff]
    %v510 = vld [vmem:[#allocation1 + $0x9] sm:$0xff]
    %v513 = vmul.f32 %v502, %v509
    %v514 = vmul.f32 %v502, %v510
    %v515 = vmax.f32 %v492, %v513
    %v516 = vmax.f32 %v493, %v514
    %v517 = vadd.f32 %v494, %v513
    %v518 = vadd.f32 %v495, %v514
    %s519 = scalar_lea.vmem [#allocation3], 21
    %v520 = vld [vmem:[%s519] ss:$8 sm:$0x3]
    %s521 = scalar_lea.vmem [#allocation3], 53
    %v522 = vld [vmem:[%s521] ss:$8 sm:$0x3]
    %523 = vset.pattern.permute.xlu0 16
    %524 = vperm.xlu0 %523, %v223
    %v525 = vpop.permute.xlu0 %524
    %529 = vst [vmem:[#allocation1] ss:$9 sm:$0xff] %v520
    %s530 = scalar_lea.vmem [#allocation1], 1
    %531 = vst [vmem:[%s530] ss:$9 sm:$0xff] %v522
    %v532 = vld [vmem:[#allocation1] sm:$0xff]
    %v533 = vld [vmem:[#allocation1 + $0x9] sm:$0xff]
    %v536 = vmul.f32 %v525, %v532
    %v537 = vmul.f32 %v525, %v533
    %v538 = vmax.f32 %v515, %v536
    %v539 = vmax.f32 %v516, %v537
    %v540 = vadd.f32 %v517, %v536
    %v541 = vadd.f32 %v518, %v537
    %s542 = scalar_lea.vmem [#allocation3], 22
    %v543 = vld [vmem:[%s542] ss:$8 sm:$0x3]
    %s544 = scalar_lea.vmem [#allocation3], 54
    %v545 = vld [vmem:[%s544] ss:$8 sm:$0x3]
    %546 = vset.pattern.permute.xlu0 17
    %547 = vperm.xlu0 %546, %v223
    %v548 = vpop.permute.xlu0 %547
    %552 = vst [vmem:[#allocation1] ss:$9 sm:$0xff] %v543
    %s553 = scalar_lea.vmem [#allocation1], 1
    %554 = vst [vmem:[%s553] ss:$9 sm:$0xff] %v545
    %v555 = vld [vmem:[#allocation1] sm:$0xff]
    %v556 = vld [vmem:[#allocation1 + $0x9] sm:$0xff]
    %v559 = vmul.f32 %v548, %v555
    %v560 = vmul.f32 %v548, %v556
    %v561 = vmax.f32 %v538, %v559
    %v562 = vmax.f32 %v539, %v560
    %v563 = vadd.f32 %v540, %v559
    %v564 = vadd.f32 %v541, %v560
    %s565 = scalar_lea.vmem [#allocation3], 23
    %v566 = vld [vmem:[%s565] ss:$8 sm:$0x3]
    %s567 = scalar_lea.vmem [#allocation3], 55
    %v568 = vld [vmem:[%s567] ss:$8 sm:$0x3]
    %569 = vset.pattern.permute.xlu0 18
    %570 = vperm.xlu0 %569, %v223
    %v571 = vpop.permute.xlu0 %570
    %575 = vst [vmem:[#allocation1] ss:$9 sm:$0xff] %v566
    %s576 = scalar_lea.vmem [#allocation1], 1
    %577 = vst [vmem:[%s576] ss:$9 sm:$0xff] %v568
    %v578 = vld [vmem:[#allocation1] sm:$0xff]
    %v579 = vld [vmem:[#allocation1 + $0x9] sm:$0xff]
    %v582 = vmul.f32 %v571, %v578
    %v583 = vmul.f32 %v571, %v579
    %v584 = vmax.f32 %v561, %v582
    %v585 = vmax.f32 %v562, %v583
    %v586 = vadd.f32 %v563, %v582
    %v587 = vadd.f32 %v564, %v583
    %v588 = vmul.f32 %v586, 0.0625
    %v589 = vmul.f32 %v587, 0.0625
    %592 = vrot.lane.b32.xlu0 %v584, 68
    %v593 = vpop.permute.xlu0 %592
    %594 = vrot.lane.b32.xlu0 %v585, 68
    %v595 = vpop.permute.xlu0 %594
    %vm596 = vcmask 556032
    %v597 = vsel %vm596, %v593, %v595
    %v601 = vsel %vm596, 0.0, %v593
    %v602 = vsel %vm596, %v595, 0.0
    %605 = vrot.lane.b32.xlu0 %v588, 68
    %v606 = vpop.permute.xlu0 %605
    %607 = vrot.lane.b32.xlu0 %v589, 68
    %v608 = vpop.permute.xlu0 %607
    %v609 = vsel %vm596, %v606, %v608
    %v613 = vsel %vm596, 0.0, %v606
    %v614 = vsel %vm596, %v608, 0.0
    %v615 = vadd.s32 %v96, 128
    %vm616 = vcmp.lt.s32.totalorder %v96, 0
    %v617 = vsub.s32 0, %v96
    %v618 = vsel %vm616, %v617, %v96
    %v619 = vshrl.u32 %v618, 4
    %v620 = vand.u32 %v618, 15
    %v621 = vsub.s32 0, %v620
    %v622 = vsel %vm616, %v621, %v620
    %vm623 = vcmp.lt.s32.totalorder %v615, 0
    %v624 = vsub.s32 0, %v615
    %v625 = vsel %vm623, %v624, %v615
    %v626 = vshrl.u32 %v625, 4
    %v627 = vand.u32 %v625, 15
    %v628 = vsub.s32 0, %v627
    %v629 = vsel %vm623, %v628, %v627
    %vm630 = vcmp.ne.s32.totalorder %v622, 0
    %vm631 = vcmp.ne.s32.totalorder %v629, 0
    %vm632 = vcmp.lt.s32.totalorder %v622, 0
    %vm633 = vcmp.lt.s32.totalorder %v629, 0
    %vm634 = vmand %vm632, %vm630
    %vm635 = vmand %vm633, %vm631
    %v636 = vadd.s32 %v622, 16
    %v637 = vadd.s32 %v629, 16
    %v638 = vsel %vm634, %v636, %v622
    %v639 = vsel %vm635, %v637, %v629
    %s640 = sld [smem:[#allocation8 + $0x4]]
    %s641 = sld [smem:[#allocation8 + $0xd]]
    %s642 = sld [smem:[#allocation8 + $0x16]]
    %s643 = sadd.f32 %s640, %s642
    %s644 = sld [smem:[#allocation8 + $0x1f]]
    %s645 = sadd.f32 %s641, %s644
    %s646 = sld [smem:[#allocation8 + $0x28]]
    %s647 = sadd.f32 %s643, %s646
    %s648 = sld [smem:[#allocation8 + $0x31]]
    %s649 = sadd.f32 %s645, %s648
    %s650 = sld [smem:[#allocation8 + $0x3a]]
    %s651 = sadd.f32 %s647, %s650
    %s652 = sld [smem:[#allocation8 + $0x43]]
    %s653 = sadd.f32 %s649, %s652
    %v654 = vstv %s651
    %v655 = vmul.f32 %v654, %v584
    %v656 = vmul.f32 %v654, %v585
    %v657 = vstv %s653
    %v658 = vmul.f32 %v657, %v588
    %v659 = vmul.f32 %v657, %v589
    %v660 = vadd.f32 %v655, %v658
    %v661 = vadd.f32 %v656, %v659
    %s662 = sld [smem:[#allocation2]]
    %v663 = vstv %s662
    %v664 = vadd.f32 %v660, %v663
    %v665 = vadd.f32 %v661, %v663
    %s666 = sld [smem:[#allocation8]]
    %v667 = vstv %s666
    %v668 = vmul.f32 %v667, %v601
    %v669 = vmul.f32 %v667, %v597
    %v670 = vmul.f32 %v667, %v602
    %s671 = sld [smem:[#allocation8 + $0x9]]
    %v672 = vstv %s671
    %v673 = vmul.f32 %v672, %v613
    %v674 = vmul.f32 %v672, %v609
    %v675 = vmul.f32 %v672, %v614
    %v676 = vadd.f32 %v668, %v673
    %v677 = vadd.f32 %v669, %v674
    %v678 = vadd.f32 %v670, %v675
    %s679 = sld [smem:[#allocation8 + $0x3]]
    %v680 = vstv %s679
    %v681 = vmul.f32 %v680, %v601
    %v682 = vmul.f32 %v680, %v597
    %v683 = vmul.f32 %v680, %v602
    %s684 = sld [smem:[#allocation8 + $0xc]]
    %v685 = vstv %s684
    %v686 = vmul.f32 %v685, %v613
    %v687 = vmul.f32 %v685, %v609
    %v688 = vmul.f32 %v685, %v614
    %v689 = vadd.f32 %v681, %v686
    %v690 = vadd.f32 %v682, %v687
    %v691 = vadd.f32 %v683, %v688
    %695 = vrot.lane.b32.xlu0 %v689, 112
    %v696 = vpop.permute.xlu0 %695
    %697 = vrot.lane.b32.xlu0 %v690, 112
    %v698 = vpop.permute.xlu0 %697
    %699 = vrot.lane.b32.xlu0 %v691, 112
    %v700 = vpop.permute.xlu0 %699
    %vm701 = vcmask 916480
    %v702 = vsel %vm701, %v696, %v698
    %v703 = vsel %vm701, %v698, %v700
    %v707 = vadd.f32 %v676, %v702
    %v708 = vadd.f32 %v677, %v703
    %v709 = vadd.f32 %v678, %v700
    %s710 = sld [smem:[#allocation8 + $0x6]]
    %v711 = vstv %s710
    %v712 = vmul.f32 %v711, %v601
    %v713 = vmul.f32 %v711, %v597
    %v714 = vmul.f32 %v711, %v602
    %s715 = sld [smem:[#allocation8 + $0xf]]
    %v716 = vstv %s715
    %v717 = vmul.f32 %v716, %v613
    %v718 = vmul.f32 %v716, %v609
    %v719 = vmul.f32 %v716, %v614
    %v720 = vadd.f32 %v712, %v717
    %v721 = vadd.f32 %v713, %v718
    %v722 = vadd.f32 %v714, %v719
    %726 = vrot.lane.b32.xlu0 %v720, 96
    %v727 = vpop.permute.xlu0 %726
    %728 = vrot.lane.b32.xlu0 %v721, 96
    %v729 = vpop.permute.xlu0 %728
    %730 = vrot.lane.b32.xlu0 %v722, 96
    %v731 = vpop.permute.xlu0 %730
    %vm732 = vcmask 785408
    %v733 = vsel %vm732, %v727, %v729
    %v734 = vsel %vm732, %v729, %v731
    %v738 = vadd.f32 %v707, %v733
    %v739 = vadd.f32 %v708, %v734
    %v740 = vadd.f32 %v709, %v731
    %v741 = vadd.s32 %v638, 4294967295
    %v742 = vadd.s32 %v639, 4294967295
    %vm743 = vcmp.ge.s32.totalorder %v741, 0
    %vm744 = vcmp.ge.s32.totalorder %v742, 0
    %vm745 = vcmp.lt.s32.totalorder %v741, 16
    %vm746 = vcmp.lt.s32.totalorder %v742, 16
    %vm747 = vmand %vm743, %vm745
    %vm748 = vmand %vm744, %vm746
    %v749 = vsel %vm747, 1, 0
    %v750 = vsel %vm748, 1, 0
    %vm751 = vcmp.eq.s32.totalorder %v749, 1
    %vm752 = vcmp.eq.s32.totalorder %v750, 1
    %756 = vrot.lane.b32.xlu0 %v738, 77
    %v757 = vpop.permute.xlu0 %756
    %758 = vrot.lane.b32.xlu0 %v739, 77
    %v759 = vpop.permute.xlu0 %758
    %760 = vrot.lane.b32.xlu0 %v740, 77
    %v761 = vpop.permute.xlu0 %760
    %vm762 = vcmask 629760
    %v763 = vsel %vm762, %v757, %v759
    %v764 = vsel %vm762, %v759, %v761
    %v767 = vsel %vm751, %v763, 0.0
    %v768 = vsel %vm752, %v764, 0.0
    %v769 = vadd.f32 %v664, %v767
    %v770 = vadd.f32 %v665, %v768
    %s771 = sld [smem:[#allocation8 + $0x1]]
    %v772 = vstv %s771
    %v773 = vmul.f32 %v772, %v601
    %v774 = vmul.f32 %v772, %v597
    %v775 = vmul.f32 %v772, %v602
    %s776 = sld [smem:[#allocation8 + $0xa]]
    %v777 = vstv %s776
    %v778 = vmul.f32 %v777, %v613
    %v779 = vmul.f32 %v777, %v609
    %v780 = vmul.f32 %v777, %v614
    %v781 = vadd.f32 %v773, %v778
    %v782 = vadd.f32 %v774, %v779
    %v783 = vadd.f32 %v775, %v780
    %s784 = sld [smem:[#allocation8 + $0x7]]
    %v785 = vstv %s784
    %v786 = vmul.f32 %v785, %v601
    %v787 = vmul.f32 %v785, %v597
    %v788 = vmul.f32 %v785, %v602
    %s789 = sld [smem:[#allocation8 + $0x10]]
    %v790 = vstv %s789
    %v791 = vmul.f32 %v790, %v613
    %v792 = vmul.f32 %v790, %v609
    %v793 = vmul.f32 %v790, %v614
    %v794 = vadd.f32 %v786, %v791
    %v795 = vadd.f32 %v787, %v792
    %v796 = vadd.f32 %v788, %v793
    %800 = vrot.lane.b32.xlu0 %v794, 96
    %v801 = vpop.permute.xlu0 %800
    %802 = vrot.lane.b32.xlu0 %v795, 96
    %v803 = vpop.permute.xlu0 %802
    %804 = vrot.lane.b32.xlu0 %v796, 96
    %v805 = vpop.permute.xlu0 %804
    %v806 = vsel %vm732, %v801, %v803
    %v807 = vsel %vm732, %v803, %v805
    %v811 = vadd.f32 %v781, %v806
    %v812 = vadd.f32 %v782, %v807
    %v813 = vadd.f32 %v783, %v805
    %817 = vrot.lane.b32.xlu0 %v811, 76
    %v818 = vpop.permute.xlu0 %817
    %819 = vrot.lane.b32.xlu0 %v812, 76
    %v820 = vpop.permute.xlu0 %819
    %821 = vrot.lane.b32.xlu0 %v813, 76
    %v822 = vpop.permute.xlu0 %821
    %vm823 = vcmask 621568
    %v824 = vsel %vm823, %v818, %v820
    %v825 = vsel %vm823, %v820, %v822
    %v828 = vadd.f32 %v769, %v824
    %v829 = vadd.f32 %v770, %v825
    %s830 = sld [smem:[#allocation8 + $0x2]]
    %v831 = vstv %s830
    %v832 = vmul.f32 %v831, %v601
    %v833 = vmul.f32 %v831, %v597
    %v834 = vmul.f32 %v831, %v602
    %s835 = sld [smem:[#allocation8 + $0xb]]
    %v836 = vstv %s835
    %v837 = vmul.f32 %v836, %v613
    %v838 = vmul.f32 %v836, %v609
    %v839 = vmul.f32 %v836, %v614
    %v840 = vadd.f32 %v832, %v837
    %v841 = vadd.f32 %v833, %v838
    %v842 = vadd.f32 %v834, %v839
    %s843 = sld [smem:[#allocation8 + $0x5]]
    %v844 = vstv %s843
    %v845 = vmul.f32 %v844, %v601
    %v846 = vmul.f32 %v844, %v597
    %v847 = vmul.f32 %v844, %v602
    %s848 = sld [smem:[#allocation8 + $0xe]]
    %v849 = vstv %s848
    %v850 = vmul.f32 %v849, %v613
    %v851 = vmul.f32 %v849, %v609
    %v852 = vmul.f32 %v849, %v614
    %v853 = vadd.f32 %v845, %v850
    %v854 = vadd.f32 %v846, %v851
    %v855 = vadd.f32 %v847, %v852
    %859 = vrot.lane.b32.xlu0 %v853, 112
    %v860 = vpop.permute.xlu0 %859
    %861 = vrot.lane.b32.xlu0 %v854, 112
    %v862 = vpop.permute.xlu0 %861
    %863 = vrot.lane.b32.xlu0 %v855, 112
    %v864 = vpop.permute.xlu0 %863
    %v865 = vsel %vm701, %v860, %v862
    %v866 = vsel %vm701, %v862, %v864
    %v870 = vadd.f32 %v840, %v865
    %v871 = vadd.f32 %v841, %v866
    %v872 = vadd.f32 %v842, %v864
    %s873 = sld [smem:[#allocation8 + $0x8]]
    %v874 = vstv %s873
    %v875 = vmul.f32 %v874, %v601
    %v876 = vmul.f32 %v874, %v597
    %v877 = vmul.f32 %v874, %v602
    %s878 = sld [smem:[#allocation8 + $0x11]]
    %v879 = vstv %s878
    %v880 = vmul.f32 %v879, %v613
    %v881 = vmul.f32 %v879, %v609
    %v882 = vmul.f32 %v879, %v614
    %v883 = vadd.f32 %v875, %v880
    %v884 = vadd.f32 %v876, %v881
    %v885 = vadd.f32 %v877, %v882
    %889 = vrot.lane.b32.xlu0 %v883, 96
    %v890 = vpop.permute.xlu0 %889
    %891 = vrot.lane.b32.xlu0 %v884, 96
    %v892 = vpop.permute.xlu0 %891
    %893 = vrot.lane.b32.xlu0 %v885, 96
    %v894 = vpop.permute.xlu0 %893
    %v895 = vsel %vm732, %v890, %v892
    %v896 = vsel %vm732, %v892, %v894
    %v900 = vadd.f32 %v870, %v895
    %v901 = vadd.f32 %v871, %v896
    %v902 = vadd.f32 %v872, %v894
    %v903 = vadd.s32 %v638, 1
    %v904 = vadd.s32 %v639, 1
    %vm905 = vcmp.ge.s32.totalorder %v903, 0
    %vm906 = vcmp.ge.s32.totalorder %v904, 0
    %vm907 = vcmp.lt.s32.totalorder %v903, 16
    %vm908 = vcmp.lt.s32.totalorder %v904, 16
    %vm909 = vmand %vm905, %vm907
    %vm910 = vmand %vm906, %vm908
    %v911 = vsel %vm909, 1, 0
    %v912 = vsel %vm910, 1, 0
    %vm913 = vcmp.eq.s32.totalorder %v911, 1
    %vm914 = vcmp.eq.s32.totalorder %v912, 1
    %918 = vrot.lane.b32.xlu0 %v900, 75
    %v919 = vpop.permute.xlu0 %918
    %920 = vrot.lane.b32.xlu0 %v901, 75
    %v921 = vpop.permute.xlu0 %920
    %922 = vrot.lane.b32.xlu0 %v902, 75
    %v923 = vpop.permute.xlu0 %922
    %vm924 = vcmask 613376
    %v925 = vsel %vm924, %v919, %v921
    %v926 = vsel %vm924, %v921, %v923
    %v929 = vsel %vm913, %v925, 0.0
    %v930 = vsel %vm914, %v926, 0.0
    %v931 = vadd.f32 %v828, %v929
    %v932 = vadd.f32 %v829, %v930
    %s933 = sld [smem:[#allocation8 + $0x12]]
    %v934 = vstv %s933
    %v935 = vmul.f32 %v934, %v601
    %v936 = vmul.f32 %v934, %v597
    %v937 = vmul.f32 %v934, %v602
    %s938 = sld [smem:[#allocation8 + $0x1b]]
    %v939 = vstv %s938
    %v940 = vmul.f32 %v939, %v613
    %v941 = vmul.f32 %v939, %v609
    %v942 = vmul.f32 %v939, %v614
    %v943 = vadd.f32 %v935, %v940
    %v944 = vadd.f32 %v936, %v941
    %v945 = vadd.f32 %v937, %v942
    %s946 = sld [smem:[#allocation8 + $0x15]]
    %v947 = vstv %s946
    %v948 = vmul.f32 %v947, %v601
    %v949 = vmul.f32 %v947, %v597
    %v950 = vmul.f32 %v947, %v602
    %s951 = sld [smem:[#allocation8 + $0x1e]]
    %v952 = vstv %s951
    %v953 = vmul.f32 %v952, %v613
    %v954 = vmul.f32 %v952, %v609
    %v955 = vmul.f32 %v952, %v614
    %v956 = vadd.f32 %v948, %v953
    %v957 = vadd.f32 %v949, %v954
    %v958 = vadd.f32 %v950, %v955
    %962 = vrot.lane.b32.xlu0 %v956, 96
    %v963 = vpop.permute.xlu0 %962
    %964 = vrot.lane.b32.xlu0 %v957, 96
    %v965 = vpop.permute.xlu0 %964
    %966 = vrot.lane.b32.xlu0 %v958, 96
    %v967 = vpop.permute.xlu0 %966
    %v968 = vsel %vm732, %v963, %v965
    %v969 = vsel %vm732, %v965, %v967
    %v973 = vadd.f32 %v943, %v968
    %v974 = vadd.f32 %v944, %v969
    %v975 = vadd.f32 %v945, %v967
    %s976 = sld [smem:[#allocation8 + $0x18]]
    %v977 = vstv %s976
    %v978 = vmul.f32 %v977, %v601
    %v979 = vmul.f32 %v977, %v597
    %v980 = vmul.f32 %v977, %v602
    %s981 = sld [smem:[#allocation8 + $0x21]]
    %v982 = vstv %s981
    %v983 = vmul.f32 %v982, %v613
    %v984 = vmul.f32 %v982, %v609
    %v985 = vmul.f32 %v982, %v614
    %v986 = vadd.f32 %v978, %v983
    %v987 = vadd.f32 %v979, %v984
    %v988 = vadd.f32 %v980, %v985
    %992 = vrot.lane.b32.xlu0 %v986, 64
    %v993 = vpop.permute.xlu0 %992
    %994 = vrot.lane.b32.xlu0 %v987, 64
    %v995 = vpop.permute.xlu0 %994
    %996 = vrot.lane.b32.xlu0 %v988, 64
    %v997 = vpop.permute.xlu0 %996
    %vm998 = vcmask 523264
    %v999 = vsel %vm998, %v993, %v995
    %v1000 = vsel %vm998, %v995, %v997
    %v1004 = vadd.f32 %v973, %v999
    %v1005 = vadd.f32 %v974, %v1000
    %v1006 = vadd.f32 %v975, %v997
    %v1007 = vadd.s32 %v638, 4294967294
    %v1008 = vadd.s32 %v639, 4294967294
    %vm1009 = vcmp.ge.s32.totalorder %v1007, 0
    %vm1010 = vcmp.ge.s32.totalorder %v1008, 0
    %vm1011 = vcmp.lt.s32.totalorder %v1007, 16
    %vm1012 = vcmp.lt.s32.totalorder %v1008, 16
    %vm1013 = vmand %vm1009, %vm1011
    %vm1014 = vmand %vm1010, %vm1012
    %v1015 = vsel %vm1013, 1, 0
    %v1016 = vsel %vm1014, 1, 0
    %vm1017 = vcmp.eq.s32.totalorder %v1015, 1
    %vm1018 = vcmp.eq.s32.totalorder %v1016, 1
    %1022 = vrot.lane.b32.xlu0 %v1004, 94
    %v1023 = vpop.permute.xlu0 %1022
    %1024 = vrot.lane.b32.xlu0 %v1005, 94
    %v1025 = vpop.permute.xlu0 %1024
    %1026 = vrot.lane.b32.xlu0 %v1006, 94
    %v1027 = vpop.permute.xlu0 %1026
    %vm1028 = vcmask 769024
    %v1029 = vsel %vm1028, %v1023, %v1025
    %v1030 = vsel %vm1028, %v1025, %v1027
    %v1033 = vsel %vm1017, %v1029, 0.0
    %v1034 = vsel %vm1018, %v1030, 0.0
    %v1035 = vadd.f32 %v931, %v1033
    %v1036 = vadd.f32 %v932, %v1034
    %s1037 = sld [smem:[#allocation8 + $0x13]]
    %v1038 = vstv %s1037
    %v1039 = vmul.f32 %v1038, %v601
    %v1040 = vmul.f32 %v1038, %v597
    %v1041 = vmul.f32 %v1038, %v602
    %s1042 = sld [smem:[#allocation8 + $0x1c]]
    %v1043 = vstv %s1042
    %v1044 = vmul.f32 %v1043, %v613
    %v1045 = vmul.f32 %v1043, %v609
    %v1046 = vmul.f32 %v1043, %v614
    %v1047 = vadd.f32 %v1039, %v1044
    %v1048 = vadd.f32 %v1040, %v1045
    %v1049 = vadd.f32 %v1041, %v1046
    %s1050 = sld [smem:[#allocation8 + $0x19]]
    %v1051 = vstv %s1050
    %v1052 = vmul.f32 %v1051, %v601
    %v1053 = vmul.f32 %v1051, %v597
    %v1054 = vmul.f32 %v1051, %v602
    %s1055 = sld [smem:[#allocation8 + $0x22]]
    %v1056 = vstv %s1055
    %v1057 = vmul.f32 %v1056, %v613
    %v1058 = vmul.f32 %v1056, %v609
    %v1059 = vmul.f32 %v1056, %v614
    %v1060 = vadd.f32 %v1052, %v1057
    %v1061 = vadd.f32 %v1053, %v1058
    %v1062 = vadd.f32 %v1054, %v1059
    %1066 = vrot.lane.b32.xlu0 %v1060, 64
    %v1067 = vpop.permute.xlu0 %1066
    %1068 = vrot.lane.b32.xlu0 %v1061, 64
    %v1069 = vpop.permute.xlu0 %1068
    %1070 = vrot.lane.b32.xlu0 %v1062, 64
    %v1071 = vpop.permute.xlu0 %1070
    %v1072 = vsel %vm998, %v1067, %v1069
    %v1073 = vsel %vm998, %v1069, %v1071
    %v1077 = vadd.f32 %v1047, %v1072
    %v1078 = vadd.f32 %v1048, %v1073
    %v1079 = vadd.f32 %v1049, %v1071
    %1083 = vrot.lane.b32.xlu0 %v1077, 92
    %v1084 = vpop.permute.xlu0 %1083
    %1085 = vrot.lane.b32.xlu0 %v1078, 92
    %v1086 = vpop.permute.xlu0 %1085
    %1087 = vrot.lane.b32.xlu0 %v1079, 92
    %v1088 = vpop.permute.xlu0 %1087
    %vm1089 = vcmask 752640
    %v1090 = vsel %vm1089, %v1084, %v1086
    %v1091 = vsel %vm1089, %v1086, %v1088
    %v1094 = vadd.f32 %v1035, %v1090
    %v1095 = vadd.f32 %v1036, %v1091
    %s1096 = sld [smem:[#allocation8 + $0x14]]
    %v1097 = vstv %s1096
    %v1098 = vmul.f32 %v1097, %v601
    %v1099 = vmul.f32 %v1097, %v597
    %v1100 = vmul.f32 %v1097, %v602
    %s1101 = sld [smem:[#allocation8 + $0x1d]]
    %v1102 = vstv %s1101
    %v1103 = vmul.f32 %v1102, %v613
    %v1104 = vmul.f32 %v1102, %v609
    %v1105 = vmul.f32 %v1102, %v614
    %v1106 = vadd.f32 %v1098, %v1103
    %v1107 = vadd.f32 %v1099, %v1104
    %v1108 = vadd.f32 %v1100, %v1105
    %s1109 = sld [smem:[#allocation8 + $0x17]]
    %v1110 = vstv %s1109
    %v1111 = vmul.f32 %v1110, %v601
    %v1112 = vmul.f32 %v1110, %v597
    %v1113 = vmul.f32 %v1110, %v602
    %s1114 = sld [smem:[#allocation8 + $0x20]]
    %v1115 = vstv %s1114
    %v1116 = vmul.f32 %v1115, %v613
    %v1117 = vmul.f32 %v1115, %v609
    %v1118 = vmul.f32 %v1115, %v614
    %v1119 = vadd.f32 %v1111, %v1116
    %v1120 = vadd.f32 %v1112, %v1117
    %v1121 = vadd.f32 %v1113, %v1118
    %1125 = vrot.lane.b32.xlu0 %v1119, 96
    %v1126 = vpop.permute.xlu0 %1125
    %1127 = vrot.lane.b32.xlu0 %v1120, 96
    %v1128 = vpop.permute.xlu0 %1127
    %1129 = vrot.lane.b32.xlu0 %v1121, 96
    %v1130 = vpop.permute.xlu0 %1129
    %v1131 = vsel %vm732, %v1126, %v1128
    %v1132 = vsel %vm732, %v1128, %v1130
    %v1136 = vadd.f32 %v1106, %v1131
    %v1137 = vadd.f32 %v1107, %v1132
    %v1138 = vadd.f32 %v1108, %v1130
    %s1139 = sld [smem:[#allocation8 + $0x1a]]
    %v1140 = vstv %s1139
    %v1141 = vmul.f32 %v1140, %v601
    %v1142 = vmul.f32 %v1140, %v597
    %v1143 = vmul.f32 %v1140, %v602
    %s1144 = sld [smem:[#allocation8 + $0x23]]
    %v1145 = vstv %s1144
    %v1146 = vmul.f32 %v1145, %v613
    %v1147 = vmul.f32 %v1145, %v609
    %v1148 = vmul.f32 %v1145, %v614
    %v1149 = vadd.f32 %v1141, %v1146
    %v1150 = vadd.f32 %v1142, %v1147
    %v1151 = vadd.f32 %v1143, %v1148
    %1155 = vrot.lane.b32.xlu0 %v1149, 64
    %v1156 = vpop.permute.xlu0 %1155
    %1157 = vrot.lane.b32.xlu0 %v1150, 64
    %v1158 = vpop.permute.xlu0 %1157
    %1159 = vrot.lane.b32.xlu0 %v1151, 64
    %v1160 = vpop.permute.xlu0 %1159
    %v1161 = vsel %vm998, %v1156, %v1158
    %v1162 = vsel %vm998, %v1158, %v1160
    %v1166 = vadd.f32 %v1136, %v1161
    %v1167 = vadd.f32 %v1137, %v1162
    %v1168 = vadd.f32 %v1138, %v1160
    %v1169 = vadd.s32 %v638, 2
    %v1170 = vadd.s32 %v639, 2
    %vm1171 = vcmp.ge.s32.totalorder %v1169, 0
    %vm1172 = vcmp.ge.s32.totalorder %v1170, 0
    %vm1173 = vcmp.lt.s32.totalorder %v1169, 16
    %vm1174 = vcmp.lt.s32.totalorder %v1170, 16
    %vm1175 = vmand %vm1171, %vm1173
    %vm1176 = vmand %vm1172, %vm1174
    %v1177 = vsel %vm1175, 1, 0
    %v1178 = vsel %vm1176, 1, 0
    %vm1179 = vcmp.eq.s32.totalorder %v1177, 1
    %vm1180 = vcmp.eq.s32.totalorder %v1178, 1
    %1184 = vrot.lane.b32.xlu0 %v1166, 90
    %v1185 = vpop.permute.xlu0 %1184
    %1186 = vrot.lane.b32.xlu0 %v1167, 90
    %v1187 = vpop.permute.xlu0 %1186
    %1188 = vrot.lane.b32.xlu0 %v1168, 90
    %v1189 = vpop.permute.xlu0 %1188
    %vm1190 = vcmask 736256
    %v1191 = vsel %vm1190, %v1185, %v1187
    %v1192 = vsel %vm1190, %v1187, %v1189
    %v1195 = vsel %vm1179, %v1191, 0.0
    %v1196 = vsel %vm1180, %v1192, 0.0
    %v1197 = vadd.f32 %v1094, %v1195
    %v1198 = vadd.f32 %v1095, %v1196
    %s1199 = sld [smem:[#allocation8 + $0x24]]
    %v1200 = vstv %s1199
    %v1201 = vmul.f32 %v1200, %v601
    %v1202 = vmul.f32 %v1200, %v597
    %v1203 = vmul.f32 %v1200, %v602
    %s1204 = sld [smem:[#allocation8 + $0x2d]]
    %v1205 = vstv %s1204
    %v1206 = vmul.f32 %v1205, %v613
    %v1207 = vmul.f32 %v1205, %v609
    %v1208 = vmul.f32 %v1205, %v614
    %v1209 = vadd.f32 %v1201, %v1206
    %v1210 = vadd.f32 %v1202, %v1207
    %v1211 = vadd.f32 %v1203, %v1208
    %s1212 = sld [smem:[#allocation8 + $0x27]]
    %v1213 = vstv %s1212
    %v1214 = vmul.f32 %v1213, %v601
    %v1215 = vmul.f32 %v1213, %v597
    %v1216 = vmul.f32 %v1213, %v602
    %s1217 = sld [smem:[#allocation8 + $0x30]]
    %v1218 = vstv %s1217
    %v1219 = vmul.f32 %v1218, %v613
    %v1220 = vmul.f32 %v1218, %v609
    %v1221 = vmul.f32 %v1218, %v614
    %v1222 = vadd.f32 %v1214, %v1219
    %v1223 = vadd.f32 %v1215, %v1220
    %v1224 = vadd.f32 %v1216, %v1221
    %1228 = vrot.lane.b32.xlu0 %v1222, 80
    %v1229 = vpop.permute.xlu0 %1228
    %1230 = vrot.lane.b32.xlu0 %v1223, 80
    %v1231 = vpop.permute.xlu0 %1230
    %1232 = vrot.lane.b32.xlu0 %v1224, 80
    %v1233 = vpop.permute.xlu0 %1232
    %vm1234 = vcmask 654336
    %v1235 = vsel %vm1234, %v1229, %v1231
    %v1236 = vsel %vm1234, %v1231, %v1233
    %v1240 = vadd.f32 %v1209, %v1235
    %v1241 = vadd.f32 %v1210, %v1236
    %v1242 = vadd.f32 %v1211, %v1233
    %s1243 = sld [smem:[#allocation8 + $0x2a]]
    %v1244 = vstv %s1243
    %v1245 = vmul.f32 %v1244, %v601
    %v1246 = vmul.f32 %v1244, %v597
    %v1247 = vmul.f32 %v1244, %v602
    %s1248 = sld [smem:[#allocation8 + $0x33]]
    %v1249 = vstv %s1248
    %v1250 = vmul.f32 %v1249, %v613
    %v1251 = vmul.f32 %v1249, %v609
    %v1252 = vmul.f32 %v1249, %v614
    %v1253 = vadd.f32 %v1245, %v1250
    %v1254 = vadd.f32 %v1246, %v1251
    %v1255 = vadd.f32 %v1247, %v1252
    %1259 = vrot.lane.b32.xlu0 %v1253, 32
    %v1260 = vpop.permute.xlu0 %1259
    %1261 = vrot.lane.b32.xlu0 %v1254, 32
    %v1262 = vpop.permute.xlu0 %1261
    %1263 = vrot.lane.b32.xlu0 %v1255, 32
    %v1264 = vpop.permute.xlu0 %1263
    %vm1265 = vcmask 261120
    %v1266 = vsel %vm1265, %v1260, %v1262
    %v1267 = vsel %vm1265, %v1262, %v1264
    %v1271 = vadd.f32 %v1240, %v1266
    %v1272 = vadd.f32 %v1241, %v1267
    %v1273 = vadd.f32 %v1242, %v1264
    %v1274 = vadd.s32 %v638, 4294967293
    %v1275 = vadd.s32 %v639, 4294967293
    %vm1276 = vcmp.ge.s32.totalorder %v1274, 0
    %vm1277 = vcmp.ge.s32.totalorder %v1275, 0
    %vm1278 = vcmp.lt.s32.totalorder %v1274, 16
    %vm1279 = vcmp.lt.s32.totalorder %v1275, 16
    %vm1280 = vmand %vm1276, %vm1278
    %vm1281 = vmand %vm1277, %vm1279
    %v1282 = vsel %vm1280, 1, 0
    %v1283 = vsel %vm1281, 1, 0
    %vm1284 = vcmp.eq.s32.totalorder %v1282, 1
    %vm1285 = vcmp.eq.s32.totalorder %v1283, 1
    %1289 = vrot.lane.b32.xlu0 %v1271, 111
    %v1290 = vpop.permute.xlu0 %1289
    %1291 = vrot.lane.b32.xlu0 %v1272, 111
    %v1292 = vpop.permute.xlu0 %1291
    %1293 = vrot.lane.b32.xlu0 %v1273, 111
    %v1294 = vpop.permute.xlu0 %1293
    %vm1295 = vcmask 908288
    %v1296 = vsel %vm1295, %v1290, %v1292
    %v1297 = vsel %vm1295, %v1292, %v1294
    %v1300 = vsel %vm1284, %v1296, 0.0
    %v1301 = vsel %vm1285, %v1297, 0.0
    %v1302 = vadd.f32 %v1197, %v1300
    %v1303 = vadd.f32 %v1198, %v1301
    %s1304 = sld [smem:[#allocation8 + $0x25]]
    %v1305 = vstv %s1304
    %v1306 = vmul.f32 %v1305, %v601
    %v1307 = vmul.f32 %v1305, %v597
    %v1308 = vmul.f32 %v1305, %v602
    %s1309 = sld [smem:[#allocation8 + $0x2e]]
    %v1310 = vstv %s1309
    %v1311 = vmul.f32 %v1310, %v613
    %v1312 = vmul.f32 %v1310, %v609
    %v1313 = vmul.f32 %v1310, %v614
    %v1314 = vadd.f32 %v1306, %v1311
    %v1315 = vadd.f32 %v1307, %v1312
    %v1316 = vadd.f32 %v1308, %v1313
    %s1317 = sld [smem:[#allocation8 + $0x2b]]
    %v1318 = vstv %s1317
    %v1319 = vmul.f32 %v1318, %v601
    %v1320 = vmul.f32 %v1318, %v597
    %v1321 = vmul.f32 %v1318, %v602
    %s1322 = sld [smem:[#allocation8 + $0x34]]
    %v1323 = vstv %s1322
    %v1324 = vmul.f32 %v1323, %v613
    %v1325 = vmul.f32 %v1323, %v609
    %v1326 = vmul.f32 %v1323, %v614
    %v1327 = vadd.f32 %v1319, %v1324
    %v1328 = vadd.f32 %v1320, %v1325
    %v1329 = vadd.f32 %v1321, %v1326
    %1333 = vrot.lane.b32.xlu0 %v1327, 32
    %v1334 = vpop.permute.xlu0 %1333
    %1335 = vrot.lane.b32.xlu0 %v1328, 32
    %v1336 = vpop.permute.xlu0 %1335
    %1337 = vrot.lane.b32.xlu0 %v1329, 32
    %v1338 = vpop.permute.xlu0 %1337
    %v1339 = vsel %vm1265, %v1334, %v1336
    %v1340 = vsel %vm1265, %v1336, %v1338
    %v1344 = vadd.f32 %v1314, %v1339
    %v1345 = vadd.f32 %v1315, %v1340
    %v1346 = vadd.f32 %v1316, %v1338
    %1350 = vrot.lane.b32.xlu0 %v1344, 108
    %v1351 = vpop.permute.xlu0 %1350
    %1352 = vrot.lane.b32.xlu0 %v1345, 108
    %v1353 = vpop.permute.xlu0 %1352
    %1354 = vrot.lane.b32.xlu0 %v1346, 108
    %v1355 = vpop.permute.xlu0 %1354
    %vm1356 = vcmask 883712
    %v1357 = vsel %vm1356, %v1351, %v1353
    %v1358 = vsel %vm1356, %v1353, %v1355
    %v1361 = vadd.f32 %v1302, %v1357
    %v1362 = vadd.f32 %v1303, %v1358
    %s1363 = sld [smem:[#allocation8 + $0x26]]
    %v1364 = vstv %s1363
    %v1365 = vmul.f32 %v1364, %v601
    %v1366 = vmul.f32 %v1364, %v597
    %v1367 = vmul.f32 %v1364, %v602
    %s1368 = sld [smem:[#allocation8 + $0x2f]]
    %v1369 = vstv %s1368
    %v1370 = vmul.f32 %v1369, %v613
    %v1371 = vmul.f32 %v1369, %v609
    %v1372 = vmul.f32 %v1369, %v614
    %v1373 = vadd.f32 %v1365, %v1370
    %v1374 = vadd.f32 %v1366, %v1371
    %v1375 = vadd.f32 %v1367, %v1372
    %s1376 = sld [smem:[#allocation8 + $0x29]]
    %v1377 = vstv %s1376
    %v1378 = vmul.f32 %v1377, %v601
    %v1379 = vmul.f32 %v1377, %v597
    %v1380 = vmul.f32 %v1377, %v602
    %s1381 = sld [smem:[#allocation8 + $0x32]]
    %v1382 = vstv %s1381
    %v1383 = vmul.f32 %v1382, %v613
    %v1384 = vmul.f32 %v1382, %v609
    %v1385 = vmul.f32 %v1382, %v614
    %v1386 = vadd.f32 %v1378, %v1383
    %v1387 = vadd.f32 %v1379, %v1384
    %v1388 = vadd.f32 %v1380, %v1385
    %1392 = vrot.lane.b32.xlu0 %v1386, 80
    %v1393 = vpop.permute.xlu0 %1392
    %1394 = vrot.lane.b32.xlu0 %v1387, 80
    %v1395 = vpop.permute.xlu0 %1394
    %1396 = vrot.lane.b32.xlu0 %v1388, 80
    %v1397 = vpop.permute.xlu0 %1396
    %v1398 = vsel %vm1234, %v1393, %v1395
    %v1399 = vsel %vm1234, %v1395, %v1397
    %v1403 = vadd.f32 %v1373, %v1398
    %v1404 = vadd.f32 %v1374, %v1399
    %v1405 = vadd.f32 %v1375, %v1397
    %s1406 = sld [smem:[#allocation8 + $0x2c]]
    %v1407 = vstv %s1406
    %v1408 = vmul.f32 %v1407, %v601
    %v1409 = vmul.f32 %v1407, %v597
    %v1410 = vmul.f32 %v1407, %v602
    %s1411 = sld [smem:[#allocation8 + $0x35]]
    %v1412 = vstv %s1411
    %v1413 = vmul.f32 %v1412, %v613
    %v1414 = vmul.f32 %v1412, %v609
    %v1415 = vmul.f32 %v1412, %v614
    %v1416 = vadd.f32 %v1408, %v1413
    %v1417 = vadd.f32 %v1409, %v1414
    %v1418 = vadd.f32 %v1410, %v1415
    %1422 = vrot.lane.b32.xlu0 %v1416, 32
    %v1423 = vpop.permute.xlu0 %1422
    %1424 = vrot.lane.b32.xlu0 %v1417, 32
    %v1425 = vpop.permute.xlu0 %1424
    %1426 = vrot.lane.b32.xlu0 %v1418, 32
    %v1427 = vpop.permute.xlu0 %1426
    %v1428 = vsel %vm1265, %v1423, %v1425
    %v1429 = vsel %vm1265, %v1425, %v1427
    %v1433 = vadd.f32 %v1403, %v1428
    %v1434 = vadd.f32 %v1404, %v1429
    %v1435 = vadd.f32 %v1405, %v1427
    %v1436 = vadd.s32 %v638, 3
    %v1437 = vadd.s32 %v639, 3
    %vm1438 = vcmp.ge.s32.totalorder %v1436, 0
    %vm1439 = vcmp.ge.s32.totalorder %v1437, 0
    %vm1440 = vcmp.lt.s32.totalorder %v1436, 16
    %vm1441 = vcmp.lt.s32.totalorder %v1437, 16
    %vm1442 = vmand %vm1438, %vm1440
    %vm1443 = vmand %vm1439, %vm1441
    %v1444 = vsel %vm1442, 1, 0
    %v1445 = vsel %vm1443, 1, 0
    %vm1446 = vcmp.eq.s32.totalorder %v1444, 1
    %vm1447 = vcmp.eq.s32.totalorder %v1445, 1
    %1451 = vrot.lane.b32.xlu0 %v1433, 105
    %v1452 = vpop.permute.xlu0 %1451
    %1453 = vrot.lane.b32.xlu0 %v1434, 105
    %v1454 = vpop.permute.xlu0 %1453
    %1455 = vrot.lane.b32.xlu0 %v1435, 105
    %v1456 = vpop.permute.xlu0 %1455
    %vm1457 = vcmask 859136
    %v1458 = vsel %vm1457, %v1452, %v1454
    %v1459 = vsel %vm1457, %v1454, %v1456
    %v1462 = vsel %vm1446, %v1458, 0.0
    %v1463 = vsel %vm1447, %v1459, 0.0
    %v1464 = vadd.f32 %v1361, %v1462
    %v1465 = vadd.f32 %v1362, %v1463
    %s1466 = sld [smem:[#allocation8 + $0x36]]
    %v1467 = vstv %s1466
    %v1468 = vmul.f32 %v1467, %v601
    %v1469 = vmul.f32 %v1467, %v597
    %s1470 = sld [smem:[#allocation8 + $0x3f]]
    %v1471 = vstv %s1470
    %v1472 = vmul.f32 %v1471, %v613
    %v1473 = vmul.f32 %v1471, %v609
    %v1474 = vadd.f32 %v1468, %v1472
    %v1475 = vadd.f32 %v1469, %v1473
    %s1476 = sld [smem:[#allocation8 + $0x39]]
    %v1477 = vstv %s1476
    %v1478 = vmul.f32 %v1477, %v601
    %v1479 = vmul.f32 %v1477, %v597
    %v1480 = vmul.f32 %v1477, %v602
    %s1481 = sld [smem:[#allocation8 + $0x42]]
    %v1482 = vstv %s1481
    %v1483 = vmul.f32 %v1482, %v613
    %v1484 = vmul.f32 %v1482, %v609
    %v1485 = vmul.f32 %v1482, %v614
    %v1486 = vadd.f32 %v1478, %v1483
    %v1487 = vadd.f32 %v1479, %v1484
    %v1488 = vadd.f32 %v1480, %v1485
    %1492 = vrot.lane.b32.xlu0 %v1486, 64
    %v1493 = vpop.permute.xlu0 %1492
    %1494 = vrot.lane.b32.xlu0 %v1487, 64
    %v1495 = vpop.permute.xlu0 %1494
    %1496 = vrot.lane.b32.xlu0 %v1488, 64
    %v1497 = vpop.permute.xlu0 %1496
    %v1498 = vsel %vm998, %v1493, %v1495
    %v1499 = vsel %vm998, %v1495, %v1497
    %v1502 = vadd.f32 %v1474, %v1498
    %v1503 = vadd.f32 %v1475, %v1499
    %s1504 = sld [smem:[#allocation8 + $0x3c]]
    %v1505 = vstv %s1504
    %v1506 = vmul.f32 %v1505, %v597
    %v1507 = vmul.f32 %v1505, %v602
    %s1508 = sld [smem:[#allocation8 + $0x45]]
    %v1509 = vstv %s1508
    %v1510 = vmul.f32 %v1509, %v609
    %v1511 = vmul.f32 %v1509, %v614
    %v1512 = vadd.f32 %v1506, %v1510
    %v1513 = vadd.f32 %v1507, %v1511
    %v1514 = vadd.f32 %v1502, %v1512
    %v1515 = vadd.f32 %v1503, %v1513
    %v1516 = vadd.s32 %v638, 4294967292
    %v1517 = vadd.s32 %v639, 4294967292
    %vm1518 = vcmp.ge.s32.totalorder %v1516, 0
    %vm1519 = vcmp.ge.s32.totalorder %v1517, 0
    %vm1520 = vcmp.lt.s32.totalorder %v1516, 16
    %vm1521 = vcmp.lt.s32.totalorder %v1517, 16
    %vm1522 = vmand %vm1518, %vm1520
    %vm1523 = vmand %vm1519, %vm1521
    %v1524 = vsel %vm1522, 1, 0
    %v1525 = vsel %vm1523, 1, 0
    %vm1526 = vcmp.eq.s32.totalorder %v1524, 1
    %vm1527 = vcmp.eq.s32.totalorder %v1525, 1
    %v1528 = vsel %vm1526, %v1514, 0.0
    %v1529 = vsel %vm1527, %v1515, 0.0
    %v1530 = vadd.f32 %v1464, %v1528
    %v1531 = vadd.f32 %v1465, %v1529
    %s1532 = sld [smem:[#allocation8 + $0x37]]
    %v1533 = vstv %s1532
    %v1534 = vmul.f32 %v1533, %v601
    %v1535 = vmul.f32 %v1533, %v597
    %v1536 = vmul.f32 %v1533, %v602
    %s1537 = sld [smem:[#allocation8 + $0x40]]
    %v1538 = vstv %s1537
    %v1539 = vmul.f32 %v1538, %v613
    %v1540 = vmul.f32 %v1538, %v609
    %v1541 = vmul.f32 %v1538, %v614
    %v1542 = vadd.f32 %v1534, %v1539
    %v1543 = vadd.f32 %v1535, %v1540
    %v1544 = vadd.f32 %v1536, %v1541
    %s1545 = sld [smem:[#allocation8 + $0x3d]]
    %v1546 = vstv %s1545
    %v1547 = vmul.f32 %v1546, %v597
    %v1548 = vmul.f32 %v1546, %v602
    %v1549 = vmul.f32 %v1546, 0.0
    %s1550 = sld [smem:[#allocation8 + $0x46]]
    %v1551 = vstv %s1550
    %v1552 = vmul.f32 %v1551, %v609
    %v1553 = vmul.f32 %v1551, %v614
    %v1554 = vmul.f32 %v1551, 0.0
    %v1555 = vadd.f32 %v1547, %v1552
    %v1556 = vadd.f32 %v1548, %v1553
    %v1557 = vadd.f32 %v1549, %v1554
    %v1558 = vadd.f32 %v1542, %v1555
    %v1559 = vadd.f32 %v1543, %v1556
    %v1560 = vadd.f32 %v1544, %v1557
    %1564 = vrot.lane.b32.xlu0 %v1558, 124
    %v1565 = vpop.permute.xlu0 %1564
    %1566 = vrot.lane.b32.xlu0 %v1559, 124
    %v1567 = vpop.permute.xlu0 %1566
    %1568 = vrot.lane.b32.xlu0 %v1560, 124
    %v1569 = vpop.permute.xlu0 %1568
    %vm1570 = vcmask 1014784
    %v1571 = vsel %vm1570, %v1565, %v1567
    %v1572 = vsel %vm1570, %v1567, %v1569
    %v1575 = vadd.f32 %v1530, %v1571
    %v1576 = vadd.f32 %v1531, %v1572
    %s1577 = sld [smem:[#allocation8 + $0x38]]
    %v1578 = vstv %s1577
    %v1579 = vmul.f32 %v1578, %v601
    %v1580 = vmul.f32 %v1578, %v597
    %v1581 = vmul.f32 %v1578, %v602
    %s1582 = sld [smem:[#allocation8 + $0x41]]
    %v1583 = vstv %s1582
    %v1584 = vmul.f32 %v1583, %v613
    %v1585 = vmul.f32 %v1583, %v609
    %v1586 = vmul.f32 %v1583, %v614
    %v1587 = vadd.f32 %v1579, %v1584
    %v1588 = vadd.f32 %v1580, %v1585
    %v1589 = vadd.f32 %v1581, %v1586
    %s1590 = sld [smem:[#allocation8 + $0x3b]]
    %v1591 = vstv %s1590
    %v1592 = vmul.f32 %v1591, %v601
    %v1593 = vmul.f32 %v1591, %v597
    %v1594 = vmul.f32 %v1591, %v602
    %s1595 = sld [smem:[#allocation8 + $0x44]]
    %v1596 = vstv %s1595
    %v1597 = vmul.f32 %v1596, %v613
    %v1598 = vmul.f32 %v1596, %v609
    %v1599 = vmul.f32 %v1596, %v614
    %v1600 = vadd.f32 %v1592, %v1597
    %v1601 = vadd.f32 %v1593, %v1598
    %v1602 = vadd.f32 %v1594, %v1599
    %1606 = vrot.lane.b32.xlu0 %v1600, 64
    %v1607 = vpop.permute.xlu0 %1606
    %1608 = vrot.lane.b32.xlu0 %v1601, 64
    %v1609 = vpop.permute.xlu0 %1608
    %1610 = vrot.lane.b32.xlu0 %v1602, 64
    %v1611 = vpop.permute.xlu0 %1610
    %v1612 = vsel %vm998, %v1607, %v1609
    %v1613 = vsel %vm998, %v1609, %v1611
    %v1617 = vadd.f32 %v1587, %v1612
    %v1618 = vadd.f32 %v1588, %v1613
    %v1619 = vadd.f32 %v1589, %v1611
    %s1620 = sld [smem:[#allocation8 + $0x3e]]
    %v1621 = vstv %s1620
    %v1622 = vmul.f32 %v1621, %v597
    %v1623 = vmul.f32 %v1621, %v602
    %v1624 = vmul.f32 %v1621, 0.0
    %s1625 = sld [smem:[#allocation8 + $0x47]]
    %v1626 = vstv %s1625
    %v1627 = vmul.f32 %v1626, %v609
    %v1628 = vmul.f32 %v1626, %v614
    %v1629 = vmul.f32 %v1626, 0.0
    %v1630 = vadd.f32 %v1622, %v1627
    %v1631 = vadd.f32 %v1623, %v1628
    %v1632 = vadd.f32 %v1624, %v1629
    %v1633 = vadd.f32 %v1617, %v1630
    %v1634 = vadd.f32 %v1618, %v1631
    %v1635 = vadd.f32 %v1619, %v1632
    %v1636 = vadd.s32 %v638, 4
    %v1637 = vadd.s32 %v639, 4
    %vm1638 = vcmp.ge.s32.totalorder %v1636, 0
    %vm1639 = vcmp.ge.s32.totalorder %v1637, 0
    %vm1640 = vcmp.lt.s32.totalorder %v1636, 16
    %vm1641 = vcmp.lt.s32.totalorder %v1637, 16
    %vm1642 = vmand %vm1638, %vm1640
    %vm1643 = vmand %vm1639, %vm1641
    %v1644 = vsel %vm1642, 1, 0
    %v1645 = vsel %vm1643, 1, 0
    %vm1646 = vcmp.eq.s32.totalorder %v1644, 1
    %vm1647 = vcmp.eq.s32.totalorder %v1645, 1
    %1651 = vrot.lane.b32.xlu0 %v1633, 120
    %v1652 = vpop.permute.xlu0 %1651
    %1653 = vrot.lane.b32.xlu0 %v1634, 120
    %v1654 = vpop.permute.xlu0 %1653
    %1655 = vrot.lane.b32.xlu0 %v1635, 120
    %v1656 = vpop.permute.xlu0 %1655
    %vm1657 = vcmask 982016
    %v1658 = vsel %vm1657, %v1652, %v1654
    %v1659 = vsel %vm1657, %v1654, %v1656
    %v1662 = vsel %vm1646, %v1658, 0.0
    %v1663 = vsel %vm1647, %v1659, 0.0
    %v1664 = vadd.f32 %v1575, %v1662
    %v1665 = vadd.f32 %v1576, %v1663
    %v1666 = vxor.u32 %v1664, 2147483648
    %v1667 = vxor.u32 %v1665, 2147483648
    %v1668 = vmul.f32 %v1666, 1.442695
    %v1669 = vpow.pop %v1668
    %v1670 = vmul.f32 %v1667, 1.442695
    %v1671 = vpow.pop %v1670
    %v1672 = vadd.f32 %v1669, 1.0
    %v1673 = vadd.f32 %v1671, 1.0
    %v1674 = vrcp.pop %v1672
    %v1675 = vmul.f32 %v1672, %v1674
    %v1676 = vsub.f32 1.0, %v1675
    %v1677 = vmul.f32 %v1674, %v1676
    %v1678 = vadd.f32 %v1674, %v1677
    %vm1679 = vweird.f32 %v1672
    %vm1680 = vweird.f32 %v1674
    %vm1681 = vmor %vm1679, %vm1680
    %v1682 = vsel %vm1681, %v1674, %v1678
    %v1683 = vand.u32 2147483647, %v1672
    %vm1684 = vcmp.eq.f32.partialorder %v1683, 8.507059e+37
    %v1685 = vand.u32 %v1672, 2147483648
    %v1686 = vor.u32 1.1754944e-38, %v1685
    %v1687 = vsel %vm1684, %v1686, %v1682
    %v1688 = vmul.f32 1.0, %v1687
    %v1689 = vrcp.pop %v1673
    %v1690 = vmul.f32 %v1673, %v1689
    %v1691 = vsub.f32 1.0, %v1690
    %v1692 = vmul.f32 %v1689, %v1691
    %v1693 = vadd.f32 %v1689, %v1692
    %vm1694 = vweird.f32 %v1673
    %vm1695 = vweird.f32 %v1689
    %vm1696 = vmor %vm1694, %vm1695
    %v1697 = vsel %vm1696, %v1689, %v1693
    %v1698 = vand.u32 2147483647, %v1673
    %vm1699 = vcmp.eq.f32.partialorder %v1698, 8.507059e+37
    %v1700 = vand.u32 %v1673, 2147483648
    %v1701 = vor.u32 1.1754944e-38, %v1700
    %v1702 = vsel %vm1699, %v1701, %v1697
    %v1703 = vmul.f32 1.0, %v1702
    %v1704 = vperm.slane %v223, 0
    %v1705 = vlaneseq
    %v1706 = vshrl.u32 %v1705, 7
    %v1707 = vadd.s32 %v1706, 3
    %1708 = vset.pattern.permute.xlu0 %v1707
    %1709 = vperm.xlu0 %1708, %v1704
    %v1710 = vpop.permute.xlu0 %1709
    %v1711 = vlaneseq
    %v1712 = vshrl.u32 %v1711, 7
    %v1713 = vadd.s32 %v1712, 11
    %1714 = vset.pattern.permute.xlu0 %v1713
    %1715 = vperm.xlu0 %1714, %v1704
    %v1716 = vpop.permute.xlu0 %1715
    %v1717 = vperm.slane %v223, 1
    %v1718 = vlaneseq
    %v1719 = vshrl.u32 %v1718, 7
    %v1720 = vadd.s32 %v1719, 3
    %1721 = vset.pattern.permute.xlu0 %v1720
    %1722 = vperm.xlu0 %1721, %v1717
    %v1723 = vpop.permute.xlu0 %1722
    %v1724 = vlaneseq
    %v1725 = vshrl.u32 %v1724, 7
    %v1726 = vadd.s32 %v1725, 11
    %1727 = vset.pattern.permute.xlu0 %v1726
    %1728 = vperm.xlu0 %1727, %v1717
    %v1729 = vpop.permute.xlu0 %1728
    %v1730 = vmul.f32 %v60, %v1710
    %v1731 = vmul.f32 %v61, %v1710
    %v1732 = vmul.f32 %v62, %v1716
    %v1733 = vmul.f32 %v63, %v1716
    %v1734 = vmul.f32 %v64, %v1723
    %v1735 = vmul.f32 %v65, %v1723
    %v1736 = vmul.f32 %v66, %v1729
    %v1737 = vmul.f32 %v67, %v1729
    %v1740 = vrot.slane %v1703, 7
    %vm1741 = vcmask 1040384
    %v1742 = vsel %vm1741, %v1688, %v1740
    %v1743 = vsel %vm106, %v1688, %v1740
    %v1744 = vrot.slane %v1743, 1
    %v1745 = vperm.slane %v1742, 0
    %v1746 = vperm.slane %v1742, 1
    %v1747 = vperm.slane %v1744, 0
    %v1748 = vperm.slane %v1744, 1
    %v1753 = vmul.f32 %v1730, %v1745
    %v1754 = vmul.f32 %v1731, %v1746
    %v1755 = vmul.f32 %v1732, %v1745
    %v1756 = vmul.f32 %v1733, %v1746
    %v1757 = vmul.f32 %v1734, %v1747
    %v1758 = vmul.f32 %v1735, %v1748
    %v1759 = vmul.f32 %v1736, %v1747
    %v1760 = vmul.f32 %v1737, %v1748
    %1761 = vst [vmem:[#allocation10] sm:$0xff] %v1753
    %1762 = vst [vmem:[#allocation10 + $0x8] sm:$0xff] %v1754
    %1763 = vst [vmem:[#allocation10 + $0x10] sm:$0xff] %v1755
    %1764 = vst [vmem:[#allocation10 + $0x18] sm:$0xff] %v1756
    %1765 = vst [vmem:[#allocation10 + $0x20] sm:$0xff] %v1757
    %1766 = vst [vmem:[#allocation10 + $0x28] sm:$0xff] %v1758
    %1767 = vst [vmem:[#allocation10 + $0x30] sm:$0xff] %v1759
    %1768 = vst [vmem:[#allocation10 + $0x38] sm:$0xff] %v1760
    // Predicated region
    $region30: #{tpu_custom_call.1} parent=1 // pred_check
      _
    $region31: #{tpu_custom_call.1} parent=1 // pred_check_branch
      %1770 = sbr.rel (0) target = $region33
    $region32: #{tpu_custom_call.1} parent=1 // pred_region
      %1772 = vsyncadd [#allocation5], 0
      %s1773 = sshll.u32 [#allocation10], 4
      %s1774 = int_to_ptr.vmem [resolvable:$true] %s1773
      %s1775 = sshll.u32 %s4, 4
      %s1776 = int_to_ptr.hbm [resolvable:$true] %s1775
      %1781 = dma.vmem_to_hbm [thread:$0]  %s1774, 1024, %s1776, [#allocation5], 256, 256, 16
    $region33: #{tpu_custom_call.1} parent=1 // pred_fallthru
      _
    // Predicated region
    $region34: #{tpu_custom_call.1} parent=1 // pred_check
      _
    $region35: #{tpu_custom_call.1} parent=1 // pred_check_branch
      %1783 = sbr.rel (0) target = $region37
    $region36: #{tpu_custom_call.1} parent=1 // pred_region
      %1785 = dma.done [#allocation5], 1024
    $region37: #{tpu_custom_call.1} parent=1 // pred_fallthru
      _
    %1786 = vsyncpa [#allocation4], 1
    %1787 = vsyncpa [#allocation5], 1
    %1788 = vsyncpa [#allocation6], 1
    %1789 = vsyncpa [#allocation9], 1

</llo_original>
